<compile_context>
chip_gen: v6e
topology: v6e:2x2x1
jax: 0.10.0
libtpu: 0.0.40
codegen_flags: <defaults>
</compile_context>

<pallas_src>
import jax
import jax.numpy as jnp
from jax.experimental import pallas as pl
from jax.experimental.pallas import tpu as pltpu

# Logical dims and lane-padded dims.
IN_F, HID_F, LAT_F, OUT_F = 784, 100, 10, 784
IN_P, HID_P, LAT_P, OUT_P = 896, 128, 128, 896

TM_TARGET = 256  # batch-tile rows (multiple of 128/256 MXU heights when B allows)


def _autoencoder_kernel(
    x_ref,            # [TM, 896]  bf16
    w1_ref, b1_ref,   # [896, 128] bf16, [1, 128] f32
    w2_ref, b2_ref,   # [128, 128] bf16, [1, 128] f32
    w3_ref, b3_ref,   # [128, 128] bf16 (BN folded), [1, 128] f32
    w4_ref, b4_ref,   # [128, 128] bf16, [1, 128] f32
    w5_ref, b5_ref,   # [128, 896] bf16, [1, 896] f32
    latent_ref,       # out: [TM, 128] f32  (first 10 lanes valid)
    recon_ref,        # out: [TM, 896] f32  (first 784 lanes valid)
):
    x = x_ref[...]  # bf16

    # ---- Encoder ----
    h1 = jnp.dot(x, w1_ref[...], preferred_element_type=jnp.float32) + b1_ref[...]
    h1 = jnp.maximum(h1, 0.0)                      # ReLU (f32 on the VPU)
    # Dropout(p=0.2): identity in eval mode.
    z2 = jnp.dot(h1.astype(jnp.bfloat16), w2_ref[...],
                 preferred_element_type=jnp.float32) + b2_ref[...]
    latent = jax.nn.sigmoid(z2)                    # f32 sigmoid (EUP)
    latent_ref[...] = latent.astype(latent_ref.dtype)

    # ---- Decoder ----
    # BatchNorm1d(10) eval-mode affine is folded into w3/b3 in the wrapper.
    # Padded latent lanes hold sigmoid(0)=0.5, but the corresponding w3 rows are
    # zero, so they contribute nothing.
    d1 = jnp.dot(latent.astype(jnp.bfloat16), w3_ref[...],
                 preferred_element_type=jnp.float32) + b3_ref[...]
    d1 = jnp.maximum(d1, 0.0)
    d2 = jnp.dot(d1.astype(jnp.bfloat16), w4_ref[...],
                 preferred_element_type=jnp.float32) + b4_ref[...]
    d2 = jnp.maximum(d2, 0.0)
    d3 = jnp.dot(d2.astype(jnp.bfloat16), w5_ref[...],
                 preferred_element_type=jnp.float32) + b5_ref[...]
    recon_ref[...] = jax.nn.sigmoid(d3).astype(recon_ref.dtype)


def _pad2(a, rows, cols, dtype):
    """Zero-pad a 2-D array to [rows, cols] and cast."""
    out = jnp.zeros((rows, cols), dtype)
    return out.at[: a.shape[0], : a.shape[1]].set(a.astype(dtype))


def _pad_row(v, cols):
    """1-D bias -> zero-padded [1, cols] f32 row."""
    out = jnp.zeros((1, cols), jnp.float32)
    return out.at[0, : v.shape[0]].set(v.astype(jnp.float32))


def autoencoder_forward(x, params):
    """x: [B, 784] float32. Returns (latent [B,10], recon [B,1,28,28])."""
    B = x.shape[0]

    # Batch tiling: pad B to a multiple of 8 (sublane), tile by TM rows.
    def _round_up(a, m):
        return (a + m - 1) // m * m

    b_pad = _round_up(B, 8)
    if b_pad <= TM_TARGET:
        tm = b_pad
    else:
        tm = TM_TARGET
        b_pad = _round_up(b_pad, tm)
    n_tiles = b_pad // tm

    # ---- Fold eval-mode BatchNorm1d(10) into the following Linear(10->100) ----
    eps = 1e-5
    bn_scale = params["bn_gamma"] / jnp.sqrt(params["bn_running_var"] + eps)
    bn_bias = params["bn_beta"] - params["bn_running_mean"] * bn_scale
    w3_folded = bn_scale[:, None] * params["w3"]          # [10, 100]
    b3_folded = params["b3"] + bn_bias @ params["w3"]     # [100]

    # ---- Lane-pad operands (zeros in padded rows/cols), bf16 weights/x ----
    x_p = jnp.zeros((b_pad, IN_P), jnp.bfloat16)
    x_p = x_p.at[:B, :IN_F].set(x.astype(jnp.bfloat16))

    w1 = _pad2(params["w1"], IN_P, HID_P, jnp.bfloat16)
    w2 = _pad2(params["w2"], HID_P, LAT_P, jnp.bfloat16)
    w3 = _pad2(w3_folded, LAT_P, HID_P, jnp.bfloat16)
    w4 = _pad2(params["w4"], HID_P, HID_P, jnp.bfloat16)
    w5 = _pad2(params["w5"], HID_P, OUT_P, jnp.bfloat16)
    b1 = _pad_row(params["b1"], HID_P)
    b2 = _pad_row(params["b2"], LAT_P)
    b3 = _pad_row(b3_folded, HID_P)
    b4 = _pad_row(params["b4"], HID_P)
    b5 = _pad_row(params["b5"], OUT_P)

    # Tiled specs for activations; weights/biases stay VMEM-resident (block (0,0)).
    def tiled(cols):
        return pl.BlockSpec((tm, cols), lambda i: (i, 0))

    def resident(shape):
        return pl.BlockSpec(shape, lambda i: (0, 0))

    in_specs = [
        tiled(IN_P),
        resident(w1.shape), resident(b1.shape),
        resident(w2.shape), resident(b2.shape),
        resident(w3.shape), resident(b3.shape),
        resident(w4.shape), resident(b4.shape),
        resident(w5.shape), resident(b5.shape),
    ]
    out_specs = (tiled(LAT_P), tiled(OUT_P))

    weight_bytes = sum(int(a.size) * a.dtype.itemsize
                       for a in (w1, w2, w3, w4, w5, b1, b2, b3, b4, b5))
    cost = pl.CostEstimate(
        flops=2 * b_pad * (IN_P * HID_P + HID_P * LAT_P + LAT_P * HID_P
                           + HID_P * HID_P + HID_P * OUT_P),
        transcendentals=b_pad * (LAT_P + OUT_P),
        bytes_accessed=(b_pad * IN_P * 2            # x (bf16)
                        + weight_bytes
                        + b_pad * LAT_P * 4         # latent out (f32)
                        + b_pad * OUT_P * 4),       # recon out (f32)
    )

    latent_p, recon_p = pl.pallas_call(
        _autoencoder_kernel,
        out_shape=(
            jax.ShapeDtypeStruct((b_pad, LAT_P), jnp.float32),
            jax.ShapeDtypeStruct((b_pad, OUT_P), jnp.float32),
        ),
        grid=(n_tiles,),
        in_specs=in_specs,
        out_specs=out_specs,
        compiler_params=pltpu.CompilerParams(
            dimension_semantics=("parallel",),
        ),
        cost_estimate=cost,
    )(x_p, w1, b1, w2, b2, w3, b3, w4, b4, w5, b5)

    latent = latent_p[:B, :LAT_F]
    recon = recon_p[:B, :OUT_F].reshape(B, 1, 28, 28)
    return latent, recon


def init_params(key):
    """Deterministic parameter init matching the PyTorch module's shapes.
    Weights are stored as [in_features, out_features] (transposed vs torch)."""
    ks = jax.random.split(key, 10)

    def linear(kw, kb, fan_in, fan_out):
        bound = 1.0 / jnp.sqrt(fan_in)
        w = jax.random.uniform(kw, (fan_in, fan_out), jnp.float32, -bound, bound)
        b = jax.random.uniform(kb, (fan_out,), jnp.float32, -bound, bound)
        return w, b

    w1, b1 = linear(ks[0], ks[1], 784, 100)
    w2, b2 = linear(ks[2], ks[3], 100, 10)
    w3, b3 = linear(ks[4], ks[5], 10, 100)
    w4, b4 = linear(ks[6], ks[7], 100, 100)
    w5, b5 = linear(ks[8], ks[9], 100, 784)

    return {
        "w1": w1, "b1": b1,
        "w2": w2, "b2": b2,
        "bn_gamma": jnp.ones((10,), jnp.float32),
        "bn_beta": jnp.zeros((10,), jnp.float32),
        "bn_running_mean": jnp.zeros((10,), jnp.float32),
        "bn_running_var": jnp.ones((10,), jnp.float32),
        "w3": w3, "b3": b3,
        "w4": w4, "b4": b4,
        "w5": w5, "b5": b5,
    }


if __name__ == "__main__":
    key = jax.random.PRNGKey(0)
    k_param, k_x = jax.random.split(key)

    params = init_params(k_param)
    B = 8
    x = jax.random.uniform(k_x, (B, 784), jnp.float32)  # flattened 28x28 images

    latent, recon = jax.jit(autoencoder_forward)(x, params)
    jax.block_until_ready((latent, recon))

    assert latent.shape == (B, 10)
    assert recon.shape == (B, 1, 28, 28)
    assert bool(jnp.all(jnp.isfinite(latent))) and bool(jnp.all(jnp.isfinite(recon)))
    # Sigmoid outputs must lie in (0, 1).
    assert bool(jnp.all((latent > 0) & (latent < 1)))
    assert bool(jnp.all((recon > 0) & (recon < 1)))

    print("KERNEL_OK")
</pallas_src>

<mosaic_0001>
module attributes {stable_mosaic.version = 11 : i64} {
  func.func @_autoencoder_kernel(%arg0: i32, %arg1: memref<8x896xbf16, #tpu.memory_space<vmem>>, %arg2: memref<896x128xbf16, #tpu.memory_space<vmem>>, %arg3: memref<1x128xf32, #tpu.memory_space<vmem>>, %arg4: memref<128x128xbf16, #tpu.memory_space<vmem>>, %arg5: memref<1x128xf32, #tpu.memory_space<vmem>>, %arg6: memref<128x128xbf16, #tpu.memory_space<vmem>>, %arg7: memref<1x128xf32, #tpu.memory_space<vmem>>, %arg8: memref<128x128xbf16, #tpu.memory_space<vmem>>, %arg9: memref<1x128xf32, #tpu.memory_space<vmem>>, %arg10: memref<128x896xbf16, #tpu.memory_space<vmem>>, %arg11: memref<1x896xf32, #tpu.memory_space<vmem>>, %arg12: memref<8x128xf32, #tpu.memory_space<vmem>>, %arg13: memref<8x896xf32, #tpu.memory_space<vmem>>) attributes {dimension_semantics = [#tpu.dimension_semantics<parallel>], iteration_bounds = array<i64: 1>, scalar_prefetch = 0 : i64, scratch_operands = 0 : i64, tpu.core_type = #tpu.core_type<tc>, window_params = [{transform_indices = @transform_0, window_bounds = array<i64: 8, 896>}, {pipeline_mode = #tpu.pipeline_mode<synchronous>, transform_indices = @transform_1, window_bounds = array<i64: 896, 128>}, {pipeline_mode = #tpu.pipeline_mode<synchronous>, transform_indices = @transform_2, window_bounds = array<i64: 1, 128>}, {pipeline_mode = #tpu.pipeline_mode<synchronous>, transform_indices = @transform_3, window_bounds = array<i64: 128, 128>}, {pipeline_mode = #tpu.pipeline_mode<synchronous>, transform_indices = @transform_4, window_bounds = array<i64: 1, 128>}, {pipeline_mode = #tpu.pipeline_mode<synchronous>, transform_indices = @transform_5, window_bounds = array<i64: 128, 128>}, {pipeline_mode = #tpu.pipeline_mode<synchronous>, transform_indices = @transform_6, window_bounds = array<i64: 1, 128>}, {pipeline_mode = #tpu.pipeline_mode<synchronous>, transform_indices = @transform_7, window_bounds = array<i64: 128, 128>}, {pipeline_mode = #tpu.pipeline_mode<synchronous>, transform_indices = @transform_8, window_bounds = array<i64: 1, 128>}, {pipeline_mode = #tpu.pipeline_mode<synchronous>, transform_indices = @transform_9, window_bounds = array<i64: 128, 896>}, {pipeline_mode = #tpu.pipeline_mode<synchronous>, transform_indices = @transform_10, window_bounds = array<i64: 1, 896>}, {transform_indices = @transform_11, window_bounds = array<i64: 8, 128>}, {transform_indices = @transform_12, window_bounds = array<i64: 8, 896>}]} {
    %c0 = arith.constant 0 : index
    %c0_0 = arith.constant 0 : index
    %0 = vector.load %arg1[%c0, %c0_0] : memref<8x896xbf16, #tpu.memory_space<vmem>>, vector<8x896xbf16>
    %c0_1 = arith.constant 0 : index
    %c0_2 = arith.constant 0 : index
    %1 = vector.load %arg2[%c0_1, %c0_2] : memref<896x128xbf16, #tpu.memory_space<vmem>>, vector<896x128xbf16>
    %cst = arith.constant dense<0.000000e+00> : vector<8x128xf32>
    %2 = tpu.matmul %0, %1, %cst {dimension_numbers = #tpu.dot_dimension_numbers<[1], [0], [0], [1], [0, 0, 1, 1], [], []>} : vector<8x896xbf16>, vector<896x128xbf16>, vector<8x128xf32> -> vector<8x128xf32>
    %c0_3 = arith.constant 0 : index
    %c0_4 = arith.constant 0 : index
    %3 = vector.load %arg3[%c0_3, %c0_4] : memref<1x128xf32, #tpu.memory_space<vmem>>, vector<1x128xf32>
    %4 = vector.broadcast %3 : vector<1x128xf32> to vector<8x128xf32>
    %5 = arith.addf %2, %4 : vector<8x128xf32>
    %cst_5 = arith.constant 0.000000e+00 : f32
    %6 = vector.broadcast %cst_5 : f32 to vector<8x128xf32>
    %7 = arith.maximumf %5, %6 : vector<8x128xf32>
    %8 = arith.truncf %7 : vector<8x128xf32> to vector<8x128xbf16>
    %c0_6 = arith.constant 0 : index
    %c0_7 = arith.constant 0 : index
    %9 = vector.load %arg4[%c0_6, %c0_7] : memref<128x128xbf16, #tpu.memory_space<vmem>>, vector<128x128xbf16>
    %cst_8 = arith.constant dense<0.000000e+00> : vector<8x128xf32>
    %10 = tpu.matmul %8, %9, %cst_8 {dimension_numbers = #tpu.dot_dimension_numbers<[1], [0], [0], [1], [0, 0, 1, 1], [], []>} : vector<8x128xbf16>, vector<128x128xbf16>, vector<8x128xf32> -> vector<8x128xf32>
    %c0_9 = arith.constant 0 : index
    %c0_10 = arith.constant 0 : index
    %11 = vector.load %arg5[%c0_9, %c0_10] : memref<1x128xf32, #tpu.memory_space<vmem>>, vector<1x128xf32>
    %12 = vector.broadcast %11 : vector<1x128xf32> to vector<8x128xf32>
    %13 = arith.addf %10, %12 : vector<8x128xf32>
    %14 = arith.negf %13 : vector<8x128xf32>
    %15 = math.exp %14 : vector<8x128xf32>
    %cst_11 = arith.constant 1.000000e+00 : f32
    %16 = vector.broadcast %cst_11 : f32 to vector<8x128xf32>
    %17 = arith.addf %16, %15 : vector<8x128xf32>
    %18 = arith.divf %16, %17 : vector<8x128xf32>
    %c0_12 = arith.constant 0 : index
    %c0_13 = arith.constant 0 : index
    %19 = vector.load %arg12[%c0_12, %c0_13] : memref<8x128xf32, #tpu.memory_space<vmem>>, vector<8x128xf32>
    tpu.vector_store %arg12[%c0_12, %c0_13], %18 {strides = array<i32>} : memref<8x128xf32, #tpu.memory_space<vmem>>, vector<8x128xf32>,
    %20 = arith.truncf %18 : vector<8x128xf32> to vector<8x128xbf16>
    %c0_14 = arith.constant 0 : index
    %c0_15 = arith.constant 0 : index
    %21 = vector.load %arg6[%c0_14, %c0_15] : memref<128x128xbf16, #tpu.memory_space<vmem>>, vector<128x128xbf16>
    %cst_16 = arith.constant dense<0.000000e+00> : vector<8x128xf32>
    %22 = tpu.matmul %20, %21, %cst_16 {dimension_numbers = #tpu.dot_dimension_numbers<[1], [0], [0], [1], [0, 0, 1, 1], [], []>} : vector<8x128xbf16>, vector<128x128xbf16>, vector<8x128xf32> -> vector<8x128xf32>
    %c0_17 = arith.constant 0 : index
    %c0_18 = arith.constant 0 : index
    %23 = vector.load %arg7[%c0_17, %c0_18] : memref<1x128xf32, #tpu.memory_space<vmem>>, vector<1x128xf32>
    %24 = vector.broadcast %23 : vector<1x128xf32> to vector<8x128xf32>
    %25 = arith.addf %22, %24 : vector<8x128xf32>
    %cst_19 = arith.constant 0.000000e+00 : f32
    %26 = vector.broadcast %cst_19 : f32 to vector<8x128xf32>
    %27 = arith.maximumf %25, %26 : vector<8x128xf32>
    %28 = arith.truncf %27 : vector<8x128xf32> to vector<8x128xbf16>
    %c0_20 = arith.constant 0 : index
    %c0_21 = arith.constant 0 : index
    %29 = vector.load %arg8[%c0_20, %c0_21] : memref<128x128xbf16, #tpu.memory_space<vmem>>, vector<128x128xbf16>
    %cst_22 = arith.constant dense<0.000000e+00> : vector<8x128xf32>
    %30 = tpu.matmul %28, %29, %cst_22 {dimension_numbers = #tpu.dot_dimension_numbers<[1], [0], [0], [1], [0, 0, 1, 1], [], []>} : vector<8x128xbf16>, vector<128x128xbf16>, vector<8x128xf32> -> vector<8x128xf32>
    %c0_23 = arith.constant 0 : index
    %c0_24 = arith.constant 0 : index
    %31 = vector.load %arg9[%c0_23, %c0_24] : memref<1x128xf32, #tpu.memory_space<vmem>>, vector<1x128xf32>
    %32 = vector.broadcast %31 : vector<1x128xf32> to vector<8x128xf32>
    %33 = arith.addf %30, %32 : vector<8x128xf32>
    %cst_25 = arith.constant 0.000000e+00 : f32
    %34 = vector.broadcast %cst_25 : f32 to vector<8x128xf32>
    %35 = arith.maximumf %33, %34 : vector<8x128xf32>
    %36 = arith.truncf %35 : vector<8x128xf32> to vector<8x128xbf16>
    %c0_26 = arith.constant 0 : index
    %c0_27 = arith.constant 0 : index
    %37 = vector.load %arg10[%c0_26, %c0_27] : memref<128x896xbf16, #tpu.memory_space<vmem>>, vector<128x896xbf16>
    %cst_28 = arith.constant dense<0.000000e+00> : vector<8x896xf32>
    %38 = tpu.matmul %36, %37, %cst_28 {dimension_numbers = #tpu.dot_dimension_numbers<[1], [0], [0], [1], [0, 0, 1, 1], [], []>} : vector<8x128xbf16>, vector<128x896xbf16>, vector<8x896xf32> -> vector<8x896xf32>
    %c0_29 = arith.constant 0 : index
    %c0_30 = arith.constant 0 : index
    %39 = vector.load %arg11[%c0_29, %c0_30] : memref<1x896xf32, #tpu.memory_space<vmem>>, vector<1x896xf32>
    %40 = vector.broadcast %39 : vector<1x896xf32> to vector<8x896xf32>
    %41 = arith.addf %38, %40 : vector<8x896xf32>
    %42 = arith.negf %41 : vector<8x896xf32>
    %43 = math.exp %42 : vector<8x896xf32>
    %cst_31 = arith.constant 1.000000e+00 : f32
    %44 = vector.broadcast %cst_31 : f32 to vector<8x896xf32>
    %45 = arith.addf %44, %43 : vector<8x896xf32>
    %46 = arith.divf %44, %45 : vector<8x896xf32>
    %c0_32 = arith.constant 0 : index
    %c0_33 = arith.constant 0 : index
    %47 = vector.load %arg13[%c0_32, %c0_33] : memref<8x896xf32, #tpu.memory_space<vmem>>, vector<8x896xf32>
    tpu.vector_store %arg13[%c0_32, %c0_33], %46 {strides = array<i32>} : memref<8x896xf32, #tpu.memory_space<vmem>>, vector<8x896xf32>,
    return
  }
  func.func @transform_0(%arg0: i32) -> (i32, i32) {
    %c0_i32 = arith.constant 0 : i32
    %c0_i32_0 = arith.constant 0 : i32
    return %arg0, %c0_i32 : i32, i32
  }
  func.func @transform_1(%arg0: i32) -> (i32, i32) {
    %c0_i32 = arith.constant 0 : i32
    %c0_i32_0 = arith.constant 0 : i32
    %c0_i32_1 = arith.constant 0 : i32
    return %c0_i32, %c0_i32_0 : i32, i32
  }
  func.func @transform_2(%arg0: i32) -> (i32, i32) {
    %c0_i32 = arith.constant 0 : i32
    %c0_i32_0 = arith.constant 0 : i32
    %c0_i32_1 = arith.constant 0 : i32
    return %c0_i32, %c0_i32_0 : i32, i32
  }
  func.func @transform_3(%arg0: i32) -> (i32, i32) {
    %c0_i32 = arith.constant 0 : i32
    %c0_i32_0 = arith.constant 0 : i32
    %c0_i32_1 = arith.constant 0 : i32
    return %c0_i32, %c0_i32_0 : i32, i32
  }
  func.func @transform_4(%arg0: i32) -> (i32, i32) {
    %c0_i32 = arith.constant 0 : i32
    %c0_i32_0 = arith.constant 0 : i32
    %c0_i32_1 = arith.constant 0 : i32
    return %c0_i32, %c0_i32_0 : i32, i32
  }
  func.func @transform_5(%arg0: i32) -> (i32, i32) {
    %c0_i32 = arith.constant 0 : i32
    %c0_i32_0 = arith.constant 0 : i32
    %c0_i32_1 = arith.constant 0 : i32
    return %c0_i32, %c0_i32_0 : i32, i32
  }
  func.func @transform_6(%arg0: i32) -> (i32, i32) {
    %c0_i32 = arith.constant 0 : i32
    %c0_i32_0 = arith.constant 0 : i32
    %c0_i32_1 = arith.constant 0 : i32
    return %c0_i32, %c0_i32_0 : i32, i32
  }
  func.func @transform_7(%arg0: i32) -> (i32, i32) {
    %c0_i32 = arith.constant 0 : i32
    %c0_i32_0 = arith.constant 0 : i32
    %c0_i32_1 = arith.constant 0 : i32
    return %c0_i32, %c0_i32_0 : i32, i32
  }
  func.func @transform_8(%arg0: i32) -> (i32, i32) {
    %c0_i32 = arith.constant 0 : i32
    %c0_i32_0 = arith.constant 0 : i32
    %c0_i32_1 = arith.constant 0 : i32
    return %c0_i32, %c0_i32_0 : i32, i32
  }
  func.func @transform_9(%arg0: i32) -> (i32, i32) {
    %c0_i32 = arith.constant 0 : i32
    %c0_i32_0 = arith.constant 0 : i32
    %c0_i32_1 = arith.constant 0 : i32
    return %c0_i32, %c0_i32_0 : i32, i32
  }
  func.func @transform_10(%arg0: i32) -> (i32, i32) {
    %c0_i32 = arith.constant 0 : i32
    %c0_i32_0 = arith.constant 0 : i32
    %c0_i32_1 = arith.constant 0 : i32
    return %c0_i32, %c0_i32_0 : i32, i32
  }
  func.func @transform_11(%arg0: i32) -> (i32, i32) {
    %c0_i32 = arith.constant 0 : i32
    %c0_i32_0 = arith.constant 0 : i32
    return %arg0, %c0_i32 : i32, i32
  }
  func.func @transform_12(%arg0: i32) -> (i32, i32) {
    %c0_i32 = arith.constant 0 : i32
    %c0_i32_0 = arith.constant 0 : i32
    return %arg0, %c0_i32 : i32, i32
  }
}

</mosaic_0001>

<llo_original>
// kernel: autoencoder_forward.1
$region0: #{autoencoder_forward.1}
  #allocation0 [shape = 'u32[]', space=smem, size = 0x4, offset = 0x4, fixed_abs, tag = 'smem constant byte address 0x4 - core index']
  #allocation1 [shape = 'u32[144,128]{1,0:T(1,128)}', space=vmem, size = 0x12000, scoped, tag = 'internal scratch']
  %s0 = inlined_call_operand.vmem [shape: bf16[8,896], index: 0, kind: input, shape index: {}]
  %s1 = inlined_call_operand.vmem [shape: bf16[896,128], index: 1, kind: input, shape index: {}]
  %s2 = inlined_call_operand.vmem [shape: f32[1,128], index: 2, kind: input, shape index: {}]
  %s3 = inlined_call_operand.vmem [shape: bf16[128,128], index: 3, kind: input, shape index: {}]
  %s4 = inlined_call_operand.vmem [shape: f32[1,128], index: 4, kind: input, shape index: {}]
  %s5 = inlined_call_operand.vmem [shape: bf16[128,128], index: 5, kind: input, shape index: {}]
  %s6 = inlined_call_operand.vmem [shape: f32[1,128], index: 6, kind: input, shape index: {}]
  %s7 = inlined_call_operand.vmem [shape: bf16[128,128], index: 7, kind: input, shape index: {}]
  %s8 = inlined_call_operand.vmem [shape: f32[1,128], index: 8, kind: input, shape index: {}]
  %s9 = inlined_call_operand.vmem [shape: bf16[128,896], index: 9, kind: input, shape index: {}]
  %s10 = inlined_call_operand.vmem [shape: f32[1,896], index: 10, kind: input, shape index: {}]
  %s11 = inlined_call_operand.hbm [shape: f32[8,128], index: 11, kind: output, shape index: {0}]
  %s12 = inlined_call_operand.vmem [shape: f32[8,896], index: 12, kind: output, shape index: {1}]
  %13 = xla_tuple %s11, %s12
  %s14 = sld [smem:[#allocation0]]
  $region62: #{autoencoder_forward.1} parent=0
    _
  %s16 = ssub.s32 1, %s14
  %s17 = scalar_select 0, %s16, %s14
  $region1: #{autoencoder_forward.1} parent=0
    #allocation2 [shape = 'u8[4096]{0}', space=vmem, size = 0x1000, scoped, tag = 'output window, operand 0, single buffered']
    #allocation3 [shape = 's32[1]{0}', space=sflag, size = 0x4, scoped, tag = 'scoped memory for autoencoder_forward.1']
    %18 = vsyncpa [#allocation3], 0
    // Predicated region
    $region2: #{autoencoder_forward.1} parent=1 // pred_check
      _
    $region3: #{autoencoder_forward.1} parent=1 // pred_check_branch
      %20 = sbr.rel (0) target = $region5
    $region4: #{autoencoder_forward.1} parent=1 // pred_region
      _
    $region5: #{autoencoder_forward.1} parent=1 // pred_fallthru
      _
    // Predicated region
    $region6: #{autoencoder_forward.1} parent=1 // pred_check
      _
    $region7: #{autoencoder_forward.1} parent=1 // pred_check_branch
      %22 = sbr.rel (0) target = $region9
    $region8: #{autoencoder_forward.1} parent=1 // pred_region
      _
    $region9: #{autoencoder_forward.1} parent=1 // pred_fallthru
      _
    // Predicated region
    $region10: #{autoencoder_forward.1} parent=1 // pred_check
      _
    $region11: #{autoencoder_forward.1} parent=1 // pred_check_branch
      %24 = sbr.rel (0) target = $region13
    $region12: #{autoencoder_forward.1} parent=1 // pred_region
      _
    $region13: #{autoencoder_forward.1} parent=1 // pred_fallthru
      _
    // Predicated region
    $region14: #{autoencoder_forward.1} parent=1 // pred_check
      _
    $region15: #{autoencoder_forward.1} parent=1 // pred_check_branch
      %26 = sbr.rel (0) target = $region17
    $region16: #{autoencoder_forward.1} parent=1 // pred_region
      _
    $region17: #{autoencoder_forward.1} parent=1 // pred_fallthru
      _
    // Predicated region
    $region18: #{autoencoder_forward.1} parent=1 // pred_check
      _
    $region19: #{autoencoder_forward.1} parent=1 // pred_check_branch
      %28 = sbr.rel (0) target = $region21
    $region20: #{autoencoder_forward.1} parent=1 // pred_region
      _
    $region21: #{autoencoder_forward.1} parent=1 // pred_fallthru
      _
    // Predicated region
    $region22: #{autoencoder_forward.1} parent=1 // pred_check
      _
    $region23: #{autoencoder_forward.1} parent=1 // pred_check_branch
      %30 = sbr.rel (0) target = $region25
    $region24: #{autoencoder_forward.1} parent=1 // pred_region
      _
    $region25: #{autoencoder_forward.1} parent=1 // pred_fallthru
      _
    // Predicated region
    $region26: #{autoencoder_forward.1} parent=1 // pred_check
      _
    $region27: #{autoencoder_forward.1} parent=1 // pred_check_branch
      %32 = sbr.rel (0) target = $region29
    $region28: #{autoencoder_forward.1} parent=1 // pred_region
      _
    $region29: #{autoencoder_forward.1} parent=1 // pred_fallthru
      _
    // Predicated region
    $region30: #{autoencoder_forward.1} parent=1 // pred_check
      _
    $region31: #{autoencoder_forward.1} parent=1 // pred_check_branch
      %34 = sbr.rel (0) target = $region33
    $region32: #{autoencoder_forward.1} parent=1 // pred_region
      _
    $region33: #{autoencoder_forward.1} parent=1 // pred_fallthru
      _
    // Predicated region
    $region34: #{autoencoder_forward.1} parent=1 // pred_check
      _
    $region35: #{autoencoder_forward.1} parent=1 // pred_check_branch
      %36 = sbr.rel (0) target = $region37
    $region36: #{autoencoder_forward.1} parent=1 // pred_region
      _
    $region37: #{autoencoder_forward.1} parent=1 // pred_fallthru
      _
    // Predicated region
    $region38: #{autoencoder_forward.1} parent=1 // pred_check
      _
    $region39: #{autoencoder_forward.1} parent=1 // pred_check_branch
      %38 = sbr.rel (0) target = $region41
    $region40: #{autoencoder_forward.1} parent=1 // pred_region
      _
    $region41: #{autoencoder_forward.1} parent=1 // pred_fallthru
      _
    // Predicated region
    $region42: #{autoencoder_forward.1} parent=1 // pred_check
      _
    $region43: #{autoencoder_forward.1} parent=1 // pred_check_branch
      %40 = sbr.rel (0) target = $region45
    $region44: #{autoencoder_forward.1} parent=1 // pred_region
      _
    $region45: #{autoencoder_forward.1} parent=1 // pred_fallthru
      _
    %v42 = vld [vmem:[%s0] sm:$0xff]
    %v43 = vld [vmem:[%s0 + $0x8] sm:$0xff]
    %v44 = vld [vmem:[%s0 + $0x10] sm:$0xff]
    %v45 = vld [vmem:[%s0 + $0x18] sm:$0xf]
    %v46 = vld [vmem:[%s1] sm:$0xf]
    %v47 = vld [vmem:[%s1 + $0x4] sm:$0xf]
    %v48 = vld [vmem:[%s1 + $0x8] sm:$0xf]
    %v49 = vld [vmem:[%s1 + $0xc] sm:$0xf]
    %v50 = vld [vmem:[%s1 + $0x10] sm:$0xf]
    %v51 = vld [vmem:[%s1 + $0x14] sm:$0xf]
    %v52 = vld [vmem:[%s1 + $0x18] sm:$0xf]
    %v53 = vld [vmem:[%s1 + $0x1c] sm:$0xf]
    %v54 = vld [vmem:[%s1 + $0x20] sm:$0xf]
    %v55 = vld [vmem:[%s1 + $0x24] sm:$0xf]
    %v56 = vld [vmem:[%s1 + $0x28] sm:$0xf]
    %v57 = vld [vmem:[%s1 + $0x2c] sm:$0xf]
    %v58 = vld [vmem:[%s1 + $0x30] sm:$0xf]
    %v59 = vld [vmem:[%s1 + $0x34] sm:$0xf]
    %v60 = vld [vmem:[%s1 + $0x38] sm:$0xf]
    %v61 = vld [vmem:[%s1 + $0x3c] sm:$0xf]
    %v62 = vld [vmem:[%s1 + $0x40] sm:$0xf]
    %v63 = vld [vmem:[%s1 + $0x44] sm:$0xf]
    %v64 = vld [vmem:[%s1 + $0x48] sm:$0xf]
    %v65 = vld [vmem:[%s1 + $0x4c] sm:$0xf]
    %v66 = vld [vmem:[%s1 + $0x50] sm:$0xf]
    %v67 = vld [vmem:[%s1 + $0x54] sm:$0xf]
    %v68 = vld [vmem:[%s1 + $0x58] sm:$0xf]
    %v69 = vld [vmem:[%s1 + $0x5c] sm:$0xf]
    %v70 = vld [vmem:[%s1 + $0x60] sm:$0xf]
    %v71 = vld [vmem:[%s1 + $0x64] sm:$0xf]
    %v72 = vld [vmem:[%s1 + $0x68] sm:$0xf]
    %v73 = vld [vmem:[%s1 + $0x6c] sm:$0xf]
    %v74 = vld [vmem:[%s1 + $0x70] sm:$0xf]
    %v75 = vld [vmem:[%s1 + $0x74] sm:$0xf]
    %v76 = vld [vmem:[%s1 + $0x78] sm:$0xf]
    %v77 = vld [vmem:[%s1 + $0x7c] sm:$0xf]
    %v78 = vld [vmem:[%s1 + $0x80] sm:$0xf]
    %v79 = vld [vmem:[%s1 + $0x84] sm:$0xf]
    %v80 = vld [vmem:[%s1 + $0x88] sm:$0xf]
    %v81 = vld [vmem:[%s1 + $0x8c] sm:$0xf]
    %v82 = vld [vmem:[%s1 + $0x90] sm:$0xf]
    %v83 = vld [vmem:[%s1 + $0x94] sm:$0xf]
    %v84 = vld [vmem:[%s1 + $0x98] sm:$0xf]
    %v85 = vld [vmem:[%s1 + $0x9c] sm:$0xf]
    %v86 = vld [vmem:[%s1 + $0xa0] sm:$0xf]
    %v87 = vld [vmem:[%s1 + $0xa4] sm:$0xf]
    %v88 = vld [vmem:[%s1 + $0xa8] sm:$0xf]
    %v89 = vld [vmem:[%s1 + $0xac] sm:$0xf]
    %v90 = vld [vmem:[%s1 + $0xb0] sm:$0xf]
    %v91 = vld [vmem:[%s1 + $0xb4] sm:$0xf]
    %v92 = vld [vmem:[%s1 + $0xb8] sm:$0xf]
    %v93 = vld [vmem:[%s1 + $0xbc] sm:$0xf]
    %v94 = vld [vmem:[%s1 + $0xc0] sm:$0xf]
    %v95 = vld [vmem:[%s1 + $0xc4] sm:$0xf]
    %v96 = vld [vmem:[%s1 + $0xc8] sm:$0xf]
    %v97 = vld [vmem:[%s1 + $0xcc] sm:$0xf]
    %v98 = vld [vmem:[%s1 + $0xd0] sm:$0xf]
    %v99 = vld [vmem:[%s1 + $0xd4] sm:$0xf]
    %v100 = vld [vmem:[%s1 + $0xd8] sm:$0xf]
    %v101 = vld [vmem:[%s1 + $0xdc] sm:$0xf]
    %v102 = vld [vmem:[%s1 + $0xe0] sm:$0xf]
    %v103 = vld [vmem:[%s1 + $0xe4] sm:$0xf]
    %v104 = vld [vmem:[%s1 + $0xe8] sm:$0xf]
    %v105 = vld [vmem:[%s1 + $0xec] sm:$0xf]
    %v106 = vld [vmem:[%s1 + $0xf0] sm:$0xf]
    %v107 = vld [vmem:[%s1 + $0xf4] sm:$0xf]
    %v108 = vld [vmem:[%s1 + $0xf8] sm:$0xf]
    %v109 = vld [vmem:[%s1 + $0xfc] sm:$0xf]
    %v110 = vld [vmem:[%s1 + $0x100] sm:$0xf]
    %v111 = vld [vmem:[%s1 + $0x104] sm:$0xf]
    %v112 = vld [vmem:[%s1 + $0x108] sm:$0xf]
    %v113 = vld [vmem:[%s1 + $0x10c] sm:$0xf]
    %v114 = vld [vmem:[%s1 + $0x110] sm:$0xf]
    %v115 = vld [vmem:[%s1 + $0x114] sm:$0xf]
    %v116 = vld [vmem:[%s1 + $0x118] sm:$0xf]
    %v117 = vld [vmem:[%s1 + $0x11c] sm:$0xf]
    %v118 = vld [vmem:[%s1 + $0x120] sm:$0xf]
    %v119 = vld [vmem:[%s1 + $0x124] sm:$0xf]
    %v120 = vld [vmem:[%s1 + $0x128] sm:$0xf]
    %v121 = vld [vmem:[%s1 + $0x12c] sm:$0xf]
    %v122 = vld [vmem:[%s1 + $0x130] sm:$0xf]
    %v123 = vld [vmem:[%s1 + $0x134] sm:$0xf]
    %v124 = vld [vmem:[%s1 + $0x138] sm:$0xf]
    %v125 = vld [vmem:[%s1 + $0x13c] sm:$0xf]
    %v126 = vld [vmem:[%s1 + $0x140] sm:$0xf]
    %v127 = vld [vmem:[%s1 + $0x144] sm:$0xf]
    %v128 = vld [vmem:[%s1 + $0x148] sm:$0xf]
    %v129 = vld [vmem:[%s1 + $0x14c] sm:$0xf]
    %v130 = vld [vmem:[%s1 + $0x150] sm:$0xf]
    %v131 = vld [vmem:[%s1 + $0x154] sm:$0xf]
    %v132 = vld [vmem:[%s1 + $0x158] sm:$0xf]
    %v133 = vld [vmem:[%s1 + $0x15c] sm:$0xf]
    %v134 = vld [vmem:[%s1 + $0x160] sm:$0xf]
    %v135 = vld [vmem:[%s1 + $0x164] sm:$0xf]
    %v136 = vld [vmem:[%s1 + $0x168] sm:$0xf]
    %v137 = vld [vmem:[%s1 + $0x16c] sm:$0xf]
    %v138 = vld [vmem:[%s1 + $0x170] sm:$0xf]
    %v139 = vld [vmem:[%s1 + $0x174] sm:$0xf]
    %v140 = vld [vmem:[%s1 + $0x178] sm:$0xf]
    %v141 = vld [vmem:[%s1 + $0x17c] sm:$0xf]
    %v142 = vld [vmem:[%s1 + $0x180] sm:$0xf]
    %v143 = vld [vmem:[%s1 + $0x184] sm:$0xf]
    %v144 = vld [vmem:[%s1 + $0x188] sm:$0xf]
    %v145 = vld [vmem:[%s1 + $0x18c] sm:$0xf]
    %v146 = vld [vmem:[%s1 + $0x190] sm:$0xf]
    %v147 = vld [vmem:[%s1 + $0x194] sm:$0xf]
    %v148 = vld [vmem:[%s1 + $0x198] sm:$0xf]
    %v149 = vld [vmem:[%s1 + $0x19c] sm:$0xf]
    %v150 = vld [vmem:[%s1 + $0x1a0] sm:$0xf]
    %v151 = vld [vmem:[%s1 + $0x1a4] sm:$0xf]
    %v152 = vld [vmem:[%s1 + $0x1a8] sm:$0xf]
    %v153 = vld [vmem:[%s1 + $0x1ac] sm:$0xf]
    %v154 = vld [vmem:[%s1 + $0x1b0] sm:$0xf]
    %v155 = vld [vmem:[%s1 + $0x1b4] sm:$0xf]
    %v156 = vld [vmem:[%s1 + $0x1b8] sm:$0xf]
    %v157 = vld [vmem:[%s1 + $0x1bc] sm:$0xf]
    %v158 = vld [vmem:[%s2] sm:$0x1]
    %v160 = vlaneseq
    %v161 = vshrl.u32 %v160, 7
    %v162 = vsub.s32 0, %v161
    %v163 = vrot.slane %v158, %v162
    %v169 = vunpack.c.l.b16 %v42
    %v170 = vunpack.c.h.b16 %v42
    %v171 = vunpack.c.l.b16 %v43
    %v172 = vunpack.c.h.b16 %v43
    %v173 = vunpack.c.l.b16 %v44
    %v174 = vunpack.c.h.b16 %v44
    %v175 = vunpack.c.l.b16 %v45
    %v176 = vpack.c.b16 %v169, %v169
    %v177 = vpack.c.b16 %v170, %v170
    %v178 = vpack.c.b16 %v171, %v171
    %v179 = vpack.c.b16 %v172, %v172
    %v180 = vpack.c.b16 %v173, %v173
    %v181 = vpack.c.b16 %v174, %v174
    %v182 = vpack.c.b16 %v175, %v175
    %v302 = vunpack.c.l.b16 %v46
    %v303 = vunpack.c.l.b16 %v47
    %v304 = vunpack.c.l.b16 %v48
    %v305 = vunpack.c.l.b16 %v49
    %v306 = vunpack.c.l.b16 %v50
    %v307 = vunpack.c.l.b16 %v51
    %v308 = vunpack.c.l.b16 %v52
    %v309 = vunpack.c.l.b16 %v53
    %v310 = vunpack.c.l.b16 %v54
    %v311 = vunpack.c.l.b16 %v55
    %v312 = vunpack.c.l.b16 %v56
    %v313 = vunpack.c.l.b16 %v57
    %v314 = vunpack.c.l.b16 %v58
    %v315 = vunpack.c.l.b16 %v59
    %v316 = vunpack.c.l.b16 %v60
    %v317 = vunpack.c.l.b16 %v61
    %v318 = vunpack.c.l.b16 %v62
    %v319 = vunpack.c.l.b16 %v63
    %v320 = vunpack.c.l.b16 %v64
    %v321 = vunpack.c.l.b16 %v65
    %v322 = vunpack.c.l.b16 %v66
    %v323 = vunpack.c.l.b16 %v67
    %v324 = vunpack.c.l.b16 %v68
    %v325 = vunpack.c.l.b16 %v69
    %v326 = vunpack.c.l.b16 %v70
    %v327 = vunpack.c.l.b16 %v71
    %v328 = vunpack.c.l.b16 %v72
    %v329 = vunpack.c.l.b16 %v73
    %v330 = vunpack.c.l.b16 %v74
    %v331 = vunpack.c.l.b16 %v75
    %v332 = vunpack.c.l.b16 %v76
    %v333 = vunpack.c.l.b16 %v77
    %v334 = vunpack.c.l.b16 %v78
    %v335 = vunpack.c.l.b16 %v79
    %v336 = vunpack.c.l.b16 %v80
    %v337 = vunpack.c.l.b16 %v81
    %v338 = vunpack.c.l.b16 %v82
    %v339 = vunpack.c.l.b16 %v83
    %v340 = vunpack.c.l.b16 %v84
    %v341 = vunpack.c.l.b16 %v85
    %v342 = vunpack.c.l.b16 %v86
    %v343 = vunpack.c.l.b16 %v87
    %v344 = vunpack.c.l.b16 %v88
    %v345 = vunpack.c.l.b16 %v89
    %v346 = vunpack.c.l.b16 %v90
    %v347 = vunpack.c.l.b16 %v91
    %v348 = vunpack.c.l.b16 %v92
    %v349 = vunpack.c.l.b16 %v93
    %v350 = vunpack.c.l.b16 %v94
    %v351 = vunpack.c.l.b16 %v95
    %v352 = vunpack.c.l.b16 %v96
    %v353 = vunpack.c.l.b16 %v97
    %v354 = vunpack.c.l.b16 %v98
    %v355 = vunpack.c.l.b16 %v99
    %v356 = vunpack.c.l.b16 %v100
    %v357 = vunpack.c.l.b16 %v101
    %v358 = vunpack.c.l.b16 %v102
    %v359 = vunpack.c.l.b16 %v103
    %v360 = vunpack.c.l.b16 %v104
    %v361 = vunpack.c.l.b16 %v105
    %v362 = vunpack.c.l.b16 %v106
    %v363 = vunpack.c.l.b16 %v107
    %v364 = vunpack.c.l.b16 %v108
    %v365 = vunpack.c.l.b16 %v109
    %v366 = vunpack.c.l.b16 %v110
    %v367 = vunpack.c.l.b16 %v111
    %v368 = vunpack.c.l.b16 %v112
    %v369 = vunpack.c.l.b16 %v113
    %v370 = vunpack.c.l.b16 %v114
    %v371 = vunpack.c.l.b16 %v115
    %v372 = vunpack.c.l.b16 %v116
    %v373 = vunpack.c.l.b16 %v117
    %v374 = vunpack.c.l.b16 %v118
    %v375 = vunpack.c.l.b16 %v119
    %v376 = vunpack.c.l.b16 %v120
    %v377 = vunpack.c.l.b16 %v121
    %v378 = vunpack.c.l.b16 %v122
    %v379 = vunpack.c.l.b16 %v123
    %v380 = vunpack.c.l.b16 %v124
    %v381 = vunpack.c.l.b16 %v125
    %v382 = vunpack.c.l.b16 %v126
    %v383 = vunpack.c.l.b16 %v127
    %v384 = vunpack.c.l.b16 %v128
    %v385 = vunpack.c.l.b16 %v129
    %v386 = vunpack.c.l.b16 %v130
    %v387 = vunpack.c.l.b16 %v131
    %v388 = vunpack.c.l.b16 %v132
    %v389 = vunpack.c.l.b16 %v133
    %v390 = vunpack.c.l.b16 %v134
    %v391 = vunpack.c.l.b16 %v135
    %v392 = vunpack.c.l.b16 %v136
    %v393 = vunpack.c.l.b16 %v137
    %v394 = vunpack.c.l.b16 %v138
    %v395 = vunpack.c.l.b16 %v139
    %v396 = vunpack.c.l.b16 %v140
    %v397 = vunpack.c.l.b16 %v141
    %v398 = vunpack.c.l.b16 %v142
    %v399 = vunpack.c.l.b16 %v143
    %v400 = vunpack.c.l.b16 %v144
    %v401 = vunpack.c.l.b16 %v145
    %v402 = vunpack.c.l.b16 %v146
    %v403 = vunpack.c.l.b16 %v147
    %v404 = vunpack.c.l.b16 %v148
    %v405 = vunpack.c.l.b16 %v149
    %v406 = vunpack.c.l.b16 %v150
    %v407 = vunpack.c.l.b16 %v151
    %v408 = vunpack.c.l.b16 %v152
    %v409 = vunpack.c.l.b16 %v153
    %v410 = vunpack.c.l.b16 %v154
    %v411 = vunpack.c.l.b16 %v155
    %v412 = vunpack.c.l.b16 %v156
    %v413 = vunpack.c.l.b16 %v157
    %v414 = vpack.c.b16 %v303, %v302
    %v415 = vpack.c.b16 %v305, %v304
    %v416 = vpack.c.b16 %v307, %v306
    %v417 = vpack.c.b16 %v309, %v308
    %v418 = vpack.c.b16 %v311, %v310
    %v419 = vpack.c.b16 %v313, %v312
    %v420 = vpack.c.b16 %v315, %v314
    %v421 = vpack.c.b16 %v317, %v316
    %v422 = vpack.c.b16 %v319, %v318
    %v423 = vpack.c.b16 %v321, %v320
    %v424 = vpack.c.b16 %v323, %v322
    %v425 = vpack.c.b16 %v325, %v324
    %v426 = vpack.c.b16 %v327, %v326
    %v427 = vpack.c.b16 %v329, %v328
    %v428 = vpack.c.b16 %v331, %v330
    %v429 = vpack.c.b16 %v333, %v332
    %v430 = vpack.c.b16 %v335, %v334
    %v431 = vpack.c.b16 %v337, %v336
    %v432 = vpack.c.b16 %v339, %v338
    %v433 = vpack.c.b16 %v341, %v340
    %v434 = vpack.c.b16 %v343, %v342
    %v435 = vpack.c.b16 %v345, %v344
    %v436 = vpack.c.b16 %v347, %v346
    %v437 = vpack.c.b16 %v349, %v348
    %v438 = vpack.c.b16 %v351, %v350
    %v439 = vpack.c.b16 %v353, %v352
    %v440 = vpack.c.b16 %v355, %v354
    %v441 = vpack.c.b16 %v357, %v356
    %v442 = vpack.c.b16 %v359, %v358
    %v443 = vpack.c.b16 %v361, %v360
    %v444 = vpack.c.b16 %v363, %v362
    %v445 = vpack.c.b16 %v365, %v364
    %v446 = vpack.c.b16 %v367, %v366
    %v447 = vpack.c.b16 %v369, %v368
    %v448 = vpack.c.b16 %v371, %v370
    %v449 = vpack.c.b16 %v373, %v372
    %v450 = vpack.c.b16 %v375, %v374
    %v451 = vpack.c.b16 %v377, %v376
    %v452 = vpack.c.b16 %v379, %v378
    %v453 = vpack.c.b16 %v381, %v380
    %v454 = vpack.c.b16 %v383, %v382
    %v455 = vpack.c.b16 %v385, %v384
    %v456 = vpack.c.b16 %v387, %v386
    %v457 = vpack.c.b16 %v389, %v388
    %v458 = vpack.c.b16 %v391, %v390
    %v459 = vpack.c.b16 %v393, %v392
    %v460 = vpack.c.b16 %v395, %v394
    %v461 = vpack.c.b16 %v397, %v396
    %v462 = vpack.c.b16 %v399, %v398
    %v463 = vpack.c.b16 %v401, %v400
    %v464 = vpack.c.b16 %v403, %v402
    %v465 = vpack.c.b16 %v405, %v404
    %v466 = vpack.c.b16 %v407, %v406
    %v467 = vpack.c.b16 %v409, %v408
    %v468 = vpack.c.b16 %v411, %v410
    %v469 = vpack.c.b16 %v413, %v412
    %526 = vmatprep.subr.bf16.mxu0 0
    %527 = vmatpush1.bf16.msra.mxu0 %v421
    %528 = vmatprep.subr.bf16.mxu0 0
    %529 = vmatpush1.bf16.msra.mxu0 %v420
    %530 = vmatprep.subr.bf16.mxu0 0
    %531 = vmatpush1.bf16.msra.mxu0 %v419
    %532 = vmatprep.subr.bf16.mxu0 0
    %533 = vmatpush1.bf16.msra.mxu0 %v418
    %534 = vmatprep.subr.bf16.mxu0 0
    %535 = vmatpush1.bf16.msra.mxu0 %v417
    %536 = vmatprep.subr.bf16.mxu0 0
    %537 = vmatpush1.bf16.msra.mxu0 %v416
    %538 = vmatprep.subr.bf16.mxu0 0
    %539 = vmatpush1.bf16.msra.mxu0 %v415
    %540 = vmatprep.subr.bf16.mxu0 0
    %541 = vmatpush1.bf16.msra.mxu0 %v414
    %542 = vmatprep.subr.bf16.mxu0 0
    %543 = vmatpush2.bf16.msra.mxu0 %v429
    %544 = vmatprep.subr.bf16.mxu0 0
    %545 = vmatpush2.bf16.msra.mxu0 %v428
    %546 = vmatprep.subr.bf16.mxu0 0
    %547 = vmatpush2.bf16.msra.mxu0 %v427
    %548 = vmatprep.subr.bf16.mxu0 0
    %549 = vmatpush2.bf16.msra.mxu0 %v426
    %550 = vmatprep.subr.bf16.mxu0 0
    %551 = vmatpush2.bf16.msra.mxu0 %v425
    %552 = vmatprep.subr.bf16.mxu0 0
    %553 = vmatpush2.bf16.msra.mxu0 %v424
    %554 = vmatprep.subr.bf16.mxu0 0
    %555 = vmatpush2.bf16.msra.mxu0 %v423
    %556 = vmatprep.subr.bf16.mxu0 0
    %557 = vmatpush2.bf16.msra.mxu0 %v422
    %558 = vmatprep.mubr.bf16.mxu0 %v177
    %559 = vmatmul.mubr.bf16.gmra.mxu0 %v176
    %v560 = vpop.f32.mrf.mxu0
    %v561 = vadd.f32 %v163, %v560
    %v562 = vpop.f32.mrf.mxu0
    %v563 = vpop.f32.mrf.mxu0
    %v564 = vpop.f32.mrf.mxu0
    %565 = vdwg.mxu0
    %566 = vmatprep.subr.bf16.mxu0 0
    %567 = vmatpush1.bf16.msra.mxu0 %v437
    %568 = vmatprep.subr.bf16.mxu0 0
    %569 = vmatpush1.bf16.msra.mxu0 %v436
    %570 = vmatprep.subr.bf16.mxu0 0
    %571 = vmatpush1.bf16.msra.mxu0 %v435
    %572 = vmatprep.subr.bf16.mxu0 0
    %573 = vmatpush1.bf16.msra.mxu0 %v434
    %574 = vmatprep.subr.bf16.mxu0 0
    %575 = vmatpush1.bf16.msra.mxu0 %v433
    %576 = vmatprep.subr.bf16.mxu0 0
    %577 = vmatpush1.bf16.msra.mxu0 %v432
    %578 = vmatprep.subr.bf16.mxu0 0
    %579 = vmatpush1.bf16.msra.mxu0 %v431
    %580 = vmatprep.subr.bf16.mxu0 0
    %581 = vmatpush1.bf16.msra.mxu0 %v430
    %582 = vmatprep.subr.bf16.mxu0 0
    %583 = vmatpush2.bf16.msra.mxu0 %v445
    %584 = vmatprep.subr.bf16.mxu0 0
    %585 = vmatpush2.bf16.msra.mxu0 %v444
    %586 = vmatprep.subr.bf16.mxu0 0
    %587 = vmatpush2.bf16.msra.mxu0 %v443
    %588 = vmatprep.subr.bf16.mxu0 0
    %589 = vmatpush2.bf16.msra.mxu0 %v442
    %590 = vmatprep.subr.bf16.mxu0 0
    %591 = vmatpush2.bf16.msra.mxu0 %v441
    %592 = vmatprep.subr.bf16.mxu0 0
    %593 = vmatpush2.bf16.msra.mxu0 %v440
    %594 = vmatprep.subr.bf16.mxu0 0
    %595 = vmatpush2.bf16.msra.mxu0 %v439
    %596 = vmatprep.subr.bf16.mxu0 0
    %597 = vmatpush2.bf16.msra.mxu0 %v438
    %598 = vmatprep.mubr.bf16.mxu0 %v179
    %599 = vmatmul.mubr.bf16.gmra.mxu0 %v178
    %v600 = vpop.f32.mrf.mxu0
    %v601 = vadd.f32 %v561, %v600
    %v602 = vpop.f32.mrf.mxu0
    %v603 = vpop.f32.mrf.mxu0
    %v604 = vpop.f32.mrf.mxu0
    %605 = vdwg.mxu0
    %606 = vmatprep.subr.bf16.mxu0 0
    %607 = vmatpush1.bf16.msra.mxu0 %v453
    %608 = vmatprep.subr.bf16.mxu0 0
    %609 = vmatpush1.bf16.msra.mxu0 %v452
    %610 = vmatprep.subr.bf16.mxu0 0
    %611 = vmatpush1.bf16.msra.mxu0 %v451
    %612 = vmatprep.subr.bf16.mxu0 0
    %613 = vmatpush1.bf16.msra.mxu0 %v450
    %614 = vmatprep.subr.bf16.mxu0 0
    %615 = vmatpush1.bf16.msra.mxu0 %v449
    %616 = vmatprep.subr.bf16.mxu0 0
    %617 = vmatpush1.bf16.msra.mxu0 %v448
    %618 = vmatprep.subr.bf16.mxu0 0
    %619 = vmatpush1.bf16.msra.mxu0 %v447
    %620 = vmatprep.subr.bf16.mxu0 0
    %621 = vmatpush1.bf16.msra.mxu0 %v446
    %622 = vmatprep.subr.bf16.mxu0 0
    %623 = vmatpush2.bf16.msra.mxu0 %v461
    %624 = vmatprep.subr.bf16.mxu0 0
    %625 = vmatpush2.bf16.msra.mxu0 %v460
    %626 = vmatprep.subr.bf16.mxu0 0
    %627 = vmatpush2.bf16.msra.mxu0 %v459
    %628 = vmatprep.subr.bf16.mxu0 0
    %629 = vmatpush2.bf16.msra.mxu0 %v458
    %630 = vmatprep.subr.bf16.mxu0 0
    %631 = vmatpush2.bf16.msra.mxu0 %v457
    %632 = vmatprep.subr.bf16.mxu0 0
    %633 = vmatpush2.bf16.msra.mxu0 %v456
    %634 = vmatprep.subr.bf16.mxu0 0
    %635 = vmatpush2.bf16.msra.mxu0 %v455
    %636 = vmatprep.subr.bf16.mxu0 0
    %637 = vmatpush2.bf16.msra.mxu0 %v454
    %638 = vmatprep.mubr.bf16.mxu0 %v181
    %639 = vmatmul.mubr.bf16.gmra.mxu0 %v180
    %v640 = vpop.f32.mrf.mxu0
    %v641 = vadd.f32 %v601, %v640
    %v642 = vpop.f32.mrf.mxu0
    %v643 = vpop.f32.mrf.mxu0
    %v644 = vpop.f32.mrf.mxu0
    %645 = vdwg.mxu0
    %646 = vmatprep.subr.bf16.mxu0 0
    %647 = vmatpush1.bf16.msra.mxu0 %v469
    %648 = vmatprep.subr.bf16.mxu0 0
    %649 = vmatpush1.bf16.msra.mxu0 %v468
    %650 = vmatprep.subr.bf16.mxu0 0
    %651 = vmatpush1.bf16.msra.mxu0 %v467
    %652 = vmatprep.subr.bf16.mxu0 0
    %653 = vmatpush1.bf16.msra.mxu0 %v466
    %654 = vmatprep.subr.bf16.mxu0 0
    %655 = vmatpush1.bf16.msra.mxu0 %v465
    %656 = vmatprep.subr.bf16.mxu0 0
    %657 = vmatpush1.bf16.msra.mxu0 %v464
    %658 = vmatprep.subr.bf16.mxu0 0
    %659 = vmatpush1.bf16.msra.mxu0 %v463
    %660 = vmatprep.subr.bf16.mxu0 0
    %661 = vmatpush1.bf16.msra.mxu0 %v462
    %662 = vmatprep.subr.bf16.mxu0 0
    %663 = vmatpush2.bf16.msra.mxu0 0
    %664 = vmatprep.subr.bf16.mxu0 0
    %665 = vmatpush2.bf16.msra.mxu0 0
    %666 = vmatprep.subr.bf16.mxu0 0
    %667 = vmatpush2.bf16.msra.mxu0 0
    %668 = vmatprep.subr.bf16.mxu0 0
    %669 = vmatpush2.bf16.msra.mxu0 0
    %670 = vmatprep.subr.bf16.mxu0 0
    %671 = vmatpush2.bf16.msra.mxu0 0
    %672 = vmatprep.subr.bf16.mxu0 0
    %673 = vmatpush2.bf16.msra.mxu0 0
    %674 = vmatprep.subr.bf16.mxu0 0
    %675 = vmatpush2.bf16.msra.mxu0 0
    %676 = vmatprep.subr.bf16.mxu0 0
    %677 = vmatpush2.bf16.msra.mxu0 0
    %678 = vmatprep.mubr.bf16.mxu0 0
    %679 = vmatmul.mubr.bf16.gmra.mxu0 %v182
    %v680 = vpop.f32.mrf.mxu0
    %v681 = vadd.f32 %v641, %v680
    %v682 = vpop.f32.mrf.mxu0
    %v683 = vpop.f32.mrf.mxu0
    %v684 = vpop.f32.mrf.mxu0
    %685 = vdwg.mxu0
    %v686 = vmax.f32 %v681, 0.0
    %v687 = vpack.c.bf16 %v686, %v686
    %v688 = vld [vmem:[%s3] sm:$0xf]
    %v689 = vld [vmem:[%s3 + $0x4] sm:$0xf]
    %v690 = vld [vmem:[%s3 + $0x8] sm:$0xf]
    %v691 = vld [vmem:[%s3 + $0xc] sm:$0xf]
    %v692 = vld [vmem:[%s3 + $0x10] sm:$0xf]
    %v693 = vld [vmem:[%s3 + $0x14] sm:$0xf]
    %v694 = vld [vmem:[%s3 + $0x18] sm:$0xf]
    %v695 = vld [vmem:[%s3 + $0x1c] sm:$0xf]
    %v696 = vld [vmem:[%s3 + $0x20] sm:$0xf]
    %v697 = vld [vmem:[%s3 + $0x24] sm:$0xf]
    %v698 = vld [vmem:[%s3 + $0x28] sm:$0xf]
    %v699 = vld [vmem:[%s3 + $0x2c] sm:$0xf]
    %v700 = vld [vmem:[%s3 + $0x30] sm:$0xf]
    %v701 = vld [vmem:[%s3 + $0x34] sm:$0xf]
    %v702 = vld [vmem:[%s3 + $0x38] sm:$0xf]
    %v703 = vld [vmem:[%s3 + $0x3c] sm:$0xf]
    %v704 = vld [vmem:[%s4] sm:$0x1]
    %v706 = vlaneseq
    %v707 = vshrl.u32 %v706, 7
    %v708 = vsub.s32 0, %v707
    %v709 = vrot.slane %v704, %v708
    %v727 = vunpack.c.l.b16 %v688
    %v728 = vunpack.c.l.b16 %v689
    %v729 = vunpack.c.l.b16 %v690
    %v730 = vunpack.c.l.b16 %v691
    %v731 = vunpack.c.l.b16 %v692
    %v732 = vunpack.c.l.b16 %v693
    %v733 = vunpack.c.l.b16 %v694
    %v734 = vunpack.c.l.b16 %v695
    %v735 = vunpack.c.l.b16 %v696
    %v736 = vunpack.c.l.b16 %v697
    %v737 = vunpack.c.l.b16 %v698
    %v738 = vunpack.c.l.b16 %v699
    %v739 = vunpack.c.l.b16 %v700
    %v740 = vunpack.c.l.b16 %v701
    %v741 = vunpack.c.l.b16 %v702
    %v742 = vunpack.c.l.b16 %v703
    %v743 = vpack.c.b16 %v728, %v727
    %v744 = vpack.c.b16 %v730, %v729
    %v745 = vpack.c.b16 %v732, %v731
    %v746 = vpack.c.b16 %v734, %v733
    %v747 = vpack.c.b16 %v736, %v735
    %v748 = vpack.c.b16 %v738, %v737
    %v749 = vpack.c.b16 %v740, %v739
    %v750 = vpack.c.b16 %v742, %v741
    %759 = vmatprep.subr.bf16.mxu0 0
    %760 = vmatpush1.bf16.msra.mxu0 %v750
    %761 = vmatprep.subr.bf16.mxu0 0
    %762 = vmatpush1.bf16.msra.mxu0 %v749
    %763 = vmatprep.subr.bf16.mxu0 0
    %764 = vmatpush1.bf16.msra.mxu0 %v748
    %765 = vmatprep.subr.bf16.mxu0 0
    %766 = vmatpush1.bf16.msra.mxu0 %v747
    %767 = vmatprep.subr.bf16.mxu0 0
    %768 = vmatpush1.bf16.msra.mxu0 %v746
    %769 = vmatprep.subr.bf16.mxu0 0
    %770 = vmatpush1.bf16.msra.mxu0 %v745
    %771 = vmatprep.subr.bf16.mxu0 0
    %772 = vmatpush1.bf16.msra.mxu0 %v744
    %773 = vmatprep.subr.bf16.mxu0 0
    %774 = vmatpush1.bf16.msra.mxu0 %v743
    %775 = vmatprep.subr.bf16.mxu0 0
    %776 = vmatpush2.bf16.msra.mxu0 0
    %777 = vmatprep.subr.bf16.mxu0 0
    %778 = vmatpush2.bf16.msra.mxu0 0
    %779 = vmatprep.subr.bf16.mxu0 0
    %780 = vmatpush2.bf16.msra.mxu0 0
    %781 = vmatprep.subr.bf16.mxu0 0
    %782 = vmatpush2.bf16.msra.mxu0 0
    %783 = vmatprep.subr.bf16.mxu0 0
    %784 = vmatpush2.bf16.msra.mxu0 0
    %785 = vmatprep.subr.bf16.mxu0 0
    %786 = vmatpush2.bf16.msra.mxu0 0
    %787 = vmatprep.subr.bf16.mxu0 0
    %788 = vmatpush2.bf16.msra.mxu0 0
    %789 = vmatprep.subr.bf16.mxu0 0
    %790 = vmatpush2.bf16.msra.mxu0 0
    %791 = vmatprep.mubr.bf16.mxu0 0
    %792 = vmatmul.mubr.bf16.gmra.mxu0 %v687
    %v793 = vpop.f32.mrf.mxu0
    %v794 = vadd.f32 %v709, %v793
    %v795 = vpop.f32.mrf.mxu0
    %v796 = vpop.f32.mrf.mxu0
    %v797 = vpop.f32.mrf.mxu0
    %798 = vdwg.mxu0
    %v799 = vxor.u32 %v794, 2147483648
    %v800 = vmul.f32 %v799, 1.442695
    %v801 = vpow.pop %v800
    %v802 = vadd.f32 %v801, 1.0
    %v803 = vrcp.pop %v802
    %v804 = vmul.f32 1.0, %v803
    %805 = vst [vmem:[#allocation2] sm:$0xff] %v804
    %v806 = vpack.c.bf16 %v804, %v804
    %v807 = vld [vmem:[%s5] sm:$0xf]
    %v808 = vld [vmem:[%s5 + $0x4] sm:$0xf]
    %v809 = vld [vmem:[%s5 + $0x8] sm:$0xf]
    %v810 = vld [vmem:[%s5 + $0xc] sm:$0xf]
    %v811 = vld [vmem:[%s5 + $0x10] sm:$0xf]
    %v812 = vld [vmem:[%s5 + $0x14] sm:$0xf]
    %v813 = vld [vmem:[%s5 + $0x18] sm:$0xf]
    %v814 = vld [vmem:[%s5 + $0x1c] sm:$0xf]
    %v815 = vld [vmem:[%s5 + $0x20] sm:$0xf]
    %v816 = vld [vmem:[%s5 + $0x24] sm:$0xf]
    %v817 = vld [vmem:[%s5 + $0x28] sm:$0xf]
    %v818 = vld [vmem:[%s5 + $0x2c] sm:$0xf]
    %v819 = vld [vmem:[%s5 + $0x30] sm:$0xf]
    %v820 = vld [vmem:[%s5 + $0x34] sm:$0xf]
    %v821 = vld [vmem:[%s5 + $0x38] sm:$0xf]
    %v822 = vld [vmem:[%s5 + $0x3c] sm:$0xf]
    %v823 = vld [vmem:[%s6] sm:$0x1]
    %v825 = vlaneseq
    %v826 = vshrl.u32 %v825, 7
    %v827 = vsub.s32 0, %v826
    %v828 = vrot.slane %v823, %v827
    %v846 = vunpack.c.l.b16 %v807
    %v847 = vunpack.c.l.b16 %v808
    %v848 = vunpack.c.l.b16 %v809
    %v849 = vunpack.c.l.b16 %v810
    %v850 = vunpack.c.l.b16 %v811
    %v851 = vunpack.c.l.b16 %v812
    %v852 = vunpack.c.l.b16 %v813
    %v853 = vunpack.c.l.b16 %v814
    %v854 = vunpack.c.l.b16 %v815
    %v855 = vunpack.c.l.b16 %v816
    %v856 = vunpack.c.l.b16 %v817
    %v857 = vunpack.c.l.b16 %v818
    %v858 = vunpack.c.l.b16 %v819
    %v859 = vunpack.c.l.b16 %v820
    %v860 = vunpack.c.l.b16 %v821
    %v861 = vunpack.c.l.b16 %v822
    %v862 = vpack.c.b16 %v847, %v846
    %v863 = vpack.c.b16 %v849, %v848
    %v864 = vpack.c.b16 %v851, %v850
    %v865 = vpack.c.b16 %v853, %v852
    %v866 = vpack.c.b16 %v855, %v854
    %v867 = vpack.c.b16 %v857, %v856
    %v868 = vpack.c.b16 %v859, %v858
    %v869 = vpack.c.b16 %v861, %v860
    %878 = vmatprep.subr.bf16.mxu0 0
    %879 = vmatpush1.bf16.msra.mxu0 %v869
    %880 = vmatprep.subr.bf16.mxu0 0
    %881 = vmatpush1.bf16.msra.mxu0 %v868
    %882 = vmatprep.subr.bf16.mxu0 0
    %883 = vmatpush1.bf16.msra.mxu0 %v867
    %884 = vmatprep.subr.bf16.mxu0 0
    %885 = vmatpush1.bf16.msra.mxu0 %v866
    %886 = vmatprep.subr.bf16.mxu0 0
    %887 = vmatpush1.bf16.msra.mxu0 %v865
    %888 = vmatprep.subr.bf16.mxu0 0
    %889 = vmatpush1.bf16.msra.mxu0 %v864
    %890 = vmatprep.subr.bf16.mxu0 0
    %891 = vmatpush1.bf16.msra.mxu0 %v863
    %892 = vmatprep.subr.bf16.mxu0 0
    %893 = vmatpush1.bf16.msra.mxu0 %v862
    %894 = vmatprep.subr.bf16.mxu0 0
    %895 = vmatpush2.bf16.msra.mxu0 0
    %896 = vmatprep.subr.bf16.mxu0 0
    %897 = vmatpush2.bf16.msra.mxu0 0
    %898 = vmatprep.subr.bf16.mxu0 0
    %899 = vmatpush2.bf16.msra.mxu0 0
    %900 = vmatprep.subr.bf16.mxu0 0
    %901 = vmatpush2.bf16.msra.mxu0 0
    %902 = vmatprep.subr.bf16.mxu0 0
    %903 = vmatpush2.bf16.msra.mxu0 0
    %904 = vmatprep.subr.bf16.mxu0 0
    %905 = vmatpush2.bf16.msra.mxu0 0
    %906 = vmatprep.subr.bf16.mxu0 0
    %907 = vmatpush2.bf16.msra.mxu0 0
    %908 = vmatprep.subr.bf16.mxu0 0
    %909 = vmatpush2.bf16.msra.mxu0 0
    %910 = vmatprep.mubr.bf16.mxu0 0
    %911 = vmatmul.mubr.bf16.gmra.mxu0 %v806
    %v912 = vpop.f32.mrf.mxu0
    %v913 = vadd.f32 %v828, %v912
    %v914 = vpop.f32.mrf.mxu0
    %v915 = vpop.f32.mrf.mxu0
    %v916 = vpop.f32.mrf.mxu0
    %917 = vdwg.mxu0
    %v918 = vmax.f32 %v913, 0.0
    %v919 = vpack.c.bf16 %v918, %v918
    %v920 = vld [vmem:[%s7] sm:$0xf]
    %v921 = vld [vmem:[%s7 + $0x4] sm:$0xf]
    %v922 = vld [vmem:[%s7 + $0x8] sm:$0xf]
    %v923 = vld [vmem:[%s7 + $0xc] sm:$0xf]
    %v924 = vld [vmem:[%s7 + $0x10] sm:$0xf]
    %v925 = vld [vmem:[%s7 + $0x14] sm:$0xf]
    %v926 = vld [vmem:[%s7 + $0x18] sm:$0xf]
    %v927 = vld [vmem:[%s7 + $0x1c] sm:$0xf]
    %v928 = vld [vmem:[%s7 + $0x20] sm:$0xf]
    %v929 = vld [vmem:[%s7 + $0x24] sm:$0xf]
    %v930 = vld [vmem:[%s7 + $0x28] sm:$0xf]
    %v931 = vld [vmem:[%s7 + $0x2c] sm:$0xf]
    %v932 = vld [vmem:[%s7 + $0x30] sm:$0xf]
    %v933 = vld [vmem:[%s7 + $0x34] sm:$0xf]
    %v934 = vld [vmem:[%s7 + $0x38] sm:$0xf]
    %v935 = vld [vmem:[%s7 + $0x3c] sm:$0xf]
    %v936 = vld [vmem:[%s8] sm:$0x1]
    %v938 = vlaneseq
    %v939 = vshrl.u32 %v938, 7
    %v940 = vsub.s32 0, %v939
    %v941 = vrot.slane %v936, %v940
    %v959 = vunpack.c.l.b16 %v920
    %v960 = vunpack.c.l.b16 %v921
    %v961 = vunpack.c.l.b16 %v922
    %v962 = vunpack.c.l.b16 %v923
    %v963 = vunpack.c.l.b16 %v924
    %v964 = vunpack.c.l.b16 %v925
    %v965 = vunpack.c.l.b16 %v926
    %v966 = vunpack.c.l.b16 %v927
    %v967 = vunpack.c.l.b16 %v928
    %v968 = vunpack.c.l.b16 %v929
    %v969 = vunpack.c.l.b16 %v930
    %v970 = vunpack.c.l.b16 %v931
    %v971 = vunpack.c.l.b16 %v932
    %v972 = vunpack.c.l.b16 %v933
    %v973 = vunpack.c.l.b16 %v934
    %v974 = vunpack.c.l.b16 %v935
    %v975 = vpack.c.b16 %v960, %v959
    %v976 = vpack.c.b16 %v962, %v961
    %v977 = vpack.c.b16 %v964, %v963
    %v978 = vpack.c.b16 %v966, %v965
    %v979 = vpack.c.b16 %v968, %v967
    %v980 = vpack.c.b16 %v970, %v969
    %v981 = vpack.c.b16 %v972, %v971
    %v982 = vpack.c.b16 %v974, %v973
    %991 = vmatprep.subr.bf16.mxu0 0
    %992 = vmatpush1.bf16.msra.mxu0 %v982
    %993 = vmatprep.subr.bf16.mxu0 0
    %994 = vmatpush1.bf16.msra.mxu0 %v981
    %995 = vmatprep.subr.bf16.mxu0 0
    %996 = vmatpush1.bf16.msra.mxu0 %v980
    %997 = vmatprep.subr.bf16.mxu0 0
    %998 = vmatpush1.bf16.msra.mxu0 %v979
    %999 = vmatprep.subr.bf16.mxu0 0
    %1000 = vmatpush1.bf16.msra.mxu0 %v978
    %1001 = vmatprep.subr.bf16.mxu0 0
    %1002 = vmatpush1.bf16.msra.mxu0 %v977
    %1003 = vmatprep.subr.bf16.mxu0 0
    %1004 = vmatpush1.bf16.msra.mxu0 %v976
    %1005 = vmatprep.subr.bf16.mxu0 0
    %1006 = vmatpush1.bf16.msra.mxu0 %v975
    %1007 = vmatprep.subr.bf16.mxu0 0
    %1008 = vmatpush2.bf16.msra.mxu0 0
    %1009 = vmatprep.subr.bf16.mxu0 0
    %1010 = vmatpush2.bf16.msra.mxu0 0
    %1011 = vmatprep.subr.bf16.mxu0 0
    %1012 = vmatpush2.bf16.msra.mxu0 0
    %1013 = vmatprep.subr.bf16.mxu0 0
    %1014 = vmatpush2.bf16.msra.mxu0 0
    %1015 = vmatprep.subr.bf16.mxu0 0
    %1016 = vmatpush2.bf16.msra.mxu0 0
    %1017 = vmatprep.subr.bf16.mxu0 0
    %1018 = vmatpush2.bf16.msra.mxu0 0
    %1019 = vmatprep.subr.bf16.mxu0 0
    %1020 = vmatpush2.bf16.msra.mxu0 0
    %1021 = vmatprep.subr.bf16.mxu0 0
    %1022 = vmatpush2.bf16.msra.mxu0 0
    %1023 = vmatprep.mubr.bf16.mxu0 0
    %1024 = vmatmul.mubr.bf16.gmra.mxu0 %v919
    %v1025 = vpop.f32.mrf.mxu0
    %v1026 = vadd.f32 %v941, %v1025
    %v1027 = vpop.f32.mrf.mxu0
    %v1028 = vpop.f32.mrf.mxu0
    %v1029 = vpop.f32.mrf.mxu0
    %1030 = vdwg.mxu0
    %v1031 = vmax.f32 %v1026, 0.0
    %v1032 = vpack.c.bf16 %v1031, %v1031
    %v1033 = vld [vmem:[%s9] sm:$0xff]
    %v1034 = vld [vmem:[%s9 + $0x8] sm:$0xff]
    %v1035 = vld [vmem:[%s9 + $0x10] sm:$0xff]
    %v1036 = vld [vmem:[%s9 + $0x18] sm:$0xf]
    %v1037 = vld [vmem:[%s9 + $0x1c] sm:$0xff]
    %v1038 = vld [vmem:[%s9 + $0x24] sm:$0xff]
    %v1039 = vld [vmem:[%s9 + $0x2c] sm:$0xff]
    %v1040 = vld [vmem:[%s9 + $0x34] sm:$0xf]
    %v1041 = vld [vmem:[%s9 + $0x38] sm:$0xff]
    %v1042 = vld [vmem:[%s9 + $0x40] sm:$0xff]
    %v1043 = vld [vmem:[%s9 + $0x48] sm:$0xff]
    %v1044 = vld [vmem:[%s9 + $0x50] sm:$0xf]
    %v1045 = vld [vmem:[%s9 + $0x54] sm:$0xff]
    %v1046 = vld [vmem:[%s9 + $0x5c] sm:$0xff]
    %v1047 = vld [vmem:[%s9 + $0x64] sm:$0xff]
    %v1048 = vld [vmem:[%s9 + $0x6c] sm:$0xf]
    %v1049 = vld [vmem:[%s9 + $0x70] sm:$0xff]
    %v1050 = vld [vmem:[%s9 + $0x78] sm:$0xff]
    %v1051 = vld [vmem:[%s9 + $0x80] sm:$0xff]
    %v1052 = vld [vmem:[%s9 + $0x88] sm:$0xf]
    %v1053 = vld [vmem:[%s9 + $0x8c] sm:$0xff]
    %v1054 = vld [vmem:[%s9 + $0x94] sm:$0xff]
    %v1055 = vld [vmem:[%s9 + $0x9c] sm:$0xff]
    %v1056 = vld [vmem:[%s9 + $0xa4] sm:$0xf]
    %v1057 = vld [vmem:[%s9 + $0xa8] sm:$0xff]
    %v1058 = vld [vmem:[%s9 + $0xb0] sm:$0xff]
    %v1059 = vld [vmem:[%s9 + $0xb8] sm:$0xff]
    %v1060 = vld [vmem:[%s9 + $0xc0] sm:$0xf]
    %v1061 = vld [vmem:[%s9 + $0xc4] sm:$0xff]
    %v1062 = vld [vmem:[%s9 + $0xcc] sm:$0xff]
    %v1063 = vld [vmem:[%s9 + $0xd4] sm:$0xff]
    %v1064 = vld [vmem:[%s9 + $0xdc] sm:$0xf]
    %v1065 = vld [vmem:[%s9 + $0xe0] sm:$0xff]
    %v1066 = vld [vmem:[%s9 + $0xe8] sm:$0xff]
    %v1067 = vld [vmem:[%s9 + $0xf0] sm:$0xff]
    %v1068 = vld [vmem:[%s9 + $0xf8] sm:$0xf]
    %v1069 = vld [vmem:[%s9 + $0xfc] sm:$0xff]
    %v1070 = vld [vmem:[%s9 + $0x104] sm:$0xff]
    %v1071 = vld [vmem:[%s9 + $0x10c] sm:$0xff]
    %v1072 = vld [vmem:[%s9 + $0x114] sm:$0xf]
    %v1073 = vld [vmem:[%s9 + $0x118] sm:$0xff]
    %v1074 = vld [vmem:[%s9 + $0x120] sm:$0xff]
    %v1075 = vld [vmem:[%s9 + $0x128] sm:$0xff]
    %v1076 = vld [vmem:[%s9 + $0x130] sm:$0xf]
    %v1077 = vld [vmem:[%s9 + $0x134] sm:$0xff]
    %v1078 = vld [vmem:[%s9 + $0x13c] sm:$0xff]
    %v1079 = vld [vmem:[%s9 + $0x144] sm:$0xff]
    %v1080 = vld [vmem:[%s9 + $0x14c] sm:$0xf]
    %v1081 = vld [vmem:[%s9 + $0x150] sm:$0xff]
    %v1082 = vld [vmem:[%s9 + $0x158] sm:$0xff]
    %v1083 = vld [vmem:[%s9 + $0x160] sm:$0xff]
    %v1084 = vld [vmem:[%s9 + $0x168] sm:$0xf]
    %v1085 = vld [vmem:[%s9 + $0x16c] sm:$0xff]
    %v1086 = vld [vmem:[%s9 + $0x174] sm:$0xff]
    %v1087 = vld [vmem:[%s9 + $0x17c] sm:$0xff]
    %v1088 = vld [vmem:[%s9 + $0x184] sm:$0xf]
    %v1089 = vld [vmem:[%s9 + $0x188] sm:$0xff]
    %v1090 = vld [vmem:[%s9 + $0x190] sm:$0xff]
    %v1091 = vld [vmem:[%s9 + $0x198] sm:$0xff]
    %v1092 = vld [vmem:[%s9 + $0x1a0] sm:$0xf]
    %v1093 = vld [vmem:[%s9 + $0x1a4] sm:$0xff]
    %v1094 = vld [vmem:[%s9 + $0x1ac] sm:$0xff]
    %v1095 = vld [vmem:[%s9 + $0x1b4] sm:$0xff]
    %v1096 = vld [vmem:[%s9 + $0x1bc] sm:$0xf]
    %v1097 = vld [vmem:[%s10] sm:$0xff]
    %v1099 = vlaneseq
    %v1100 = vshrl.u32 %v1099, 7
    %v1101 = vsub.s32 0, %v1100
    %v1102 = vrot.slane %v1097, %v1101
    %v1103 = vlaneseq
    %v1104 = vshrl.u32 %v1103, 7
    %v1105 = vsub.s32 1, %v1104
    %v1106 = vrot.slane %v1097, %v1105
    %v1107 = vlaneseq
    %v1108 = vshrl.u32 %v1107, 7
    %v1109 = vsub.s32 2, %v1108
    %v1110 = vrot.slane %v1097, %v1109
    %v1111 = vlaneseq
    %v1112 = vshrl.u32 %v1111, 7
    %v1113 = vsub.s32 3, %v1112
    %v1114 = vrot.slane %v1097, %v1113
    %v1115 = vlaneseq
    %v1116 = vshrl.u32 %v1115, 7
    %v1117 = vsub.s32 4, %v1116
    %v1118 = vrot.slane %v1097, %v1117
    %v1119 = vlaneseq
    %v1120 = vshrl.u32 %v1119, 7
    %v1121 = vsub.s32 5, %v1120
    %v1122 = vrot.slane %v1097, %v1121
    %v1123 = vlaneseq
    %v1124 = vshrl.u32 %v1123, 7
    %v1125 = vsub.s32 6, %v1124
    %v1126 = vrot.slane %v1097, %v1125
    %v1198 = vunpack.c.l.b16 %v1033
    %v1199 = vunpack.c.h.b16 %v1033
    %v1200 = vunpack.c.l.b16 %v1034
    %v1201 = vunpack.c.h.b16 %v1034
    %v1202 = vunpack.c.l.b16 %v1035
    %v1203 = vunpack.c.h.b16 %v1035
    %v1204 = vunpack.c.l.b16 %v1036
    %v1205 = vunpack.c.l.b16 %v1037
    %v1206 = vunpack.c.h.b16 %v1037
    %v1207 = vunpack.c.l.b16 %v1038
    %v1208 = vunpack.c.h.b16 %v1038
    %v1209 = vunpack.c.l.b16 %v1039
    %v1210 = vunpack.c.h.b16 %v1039
    %v1211 = vunpack.c.l.b16 %v1040
    %v1212 = vunpack.c.l.b16 %v1041
    %v1213 = vunpack.c.h.b16 %v1041
    %v1214 = vunpack.c.l.b16 %v1042
    %v1215 = vunpack.c.h.b16 %v1042
    %v1216 = vunpack.c.l.b16 %v1043
    %v1217 = vunpack.c.h.b16 %v1043
    %v1218 = vunpack.c.l.b16 %v1044
    %v1219 = vunpack.c.l.b16 %v1045
    %v1220 = vunpack.c.h.b16 %v1045
    %v1221 = vunpack.c.l.b16 %v1046
    %v1222 = vunpack.c.h.b16 %v1046
    %v1223 = vunpack.c.l.b16 %v1047
    %v1224 = vunpack.c.h.b16 %v1047
    %v1225 = vunpack.c.l.b16 %v1048
    %v1226 = vunpack.c.l.b16 %v1049
    %v1227 = vunpack.c.h.b16 %v1049
    %v1228 = vunpack.c.l.b16 %v1050
    %v1229 = vunpack.c.h.b16 %v1050
    %v1230 = vunpack.c.l.b16 %v1051
    %v1231 = vunpack.c.h.b16 %v1051
    %v1232 = vunpack.c.l.b16 %v1052
    %v1233 = vunpack.c.l.b16 %v1053
    %v1234 = vunpack.c.h.b16 %v1053
    %v1235 = vunpack.c.l.b16 %v1054
    %v1236 = vunpack.c.h.b16 %v1054
    %v1237 = vunpack.c.l.b16 %v1055
    %v1238 = vunpack.c.h.b16 %v1055
    %v1239 = vunpack.c.l.b16 %v1056
    %v1240 = vunpack.c.l.b16 %v1057
    %v1241 = vunpack.c.h.b16 %v1057
    %v1242 = vunpack.c.l.b16 %v1058
    %v1243 = vunpack.c.h.b16 %v1058
    %v1244 = vunpack.c.l.b16 %v1059
    %v1245 = vunpack.c.h.b16 %v1059
    %v1246 = vunpack.c.l.b16 %v1060
    %v1247 = vunpack.c.l.b16 %v1061
    %v1248 = vunpack.c.h.b16 %v1061
    %v1249 = vunpack.c.l.b16 %v1062
    %v1250 = vunpack.c.h.b16 %v1062
    %v1251 = vunpack.c.l.b16 %v1063
    %v1252 = vunpack.c.h.b16 %v1063
    %v1253 = vunpack.c.l.b16 %v1064
    %v1254 = vunpack.c.l.b16 %v1065
    %v1255 = vunpack.c.h.b16 %v1065
    %v1256 = vunpack.c.l.b16 %v1066
    %v1257 = vunpack.c.h.b16 %v1066
    %v1258 = vunpack.c.l.b16 %v1067
    %v1259 = vunpack.c.h.b16 %v1067
    %v1260 = vunpack.c.l.b16 %v1068
    %v1261 = vunpack.c.l.b16 %v1069
    %v1262 = vunpack.c.h.b16 %v1069
    %v1263 = vunpack.c.l.b16 %v1070
    %v1264 = vunpack.c.h.b16 %v1070
    %v1265 = vunpack.c.l.b16 %v1071
    %v1266 = vunpack.c.h.b16 %v1071
    %v1267 = vunpack.c.l.b16 %v1072
    %v1268 = vunpack.c.l.b16 %v1073
    %v1269 = vunpack.c.h.b16 %v1073
    %v1270 = vunpack.c.l.b16 %v1074
    %v1271 = vunpack.c.h.b16 %v1074
    %v1272 = vunpack.c.l.b16 %v1075
    %v1273 = vunpack.c.h.b16 %v1075
    %v1274 = vunpack.c.l.b16 %v1076
    %v1275 = vunpack.c.l.b16 %v1077
    %v1276 = vunpack.c.h.b16 %v1077
    %v1277 = vunpack.c.l.b16 %v1078
    %v1278 = vunpack.c.h.b16 %v1078
    %v1279 = vunpack.c.l.b16 %v1079
    %v1280 = vunpack.c.h.b16 %v1079
    %v1281 = vunpack.c.l.b16 %v1080
    %v1282 = vunpack.c.l.b16 %v1081
    %v1283 = vunpack.c.h.b16 %v1081
    %v1284 = vunpack.c.l.b16 %v1082
    %v1285 = vunpack.c.h.b16 %v1082
    %v1286 = vunpack.c.l.b16 %v1083
    %v1287 = vunpack.c.h.b16 %v1083
    %v1288 = vunpack.c.l.b16 %v1084
    %v1289 = vunpack.c.l.b16 %v1085
    %v1290 = vunpack.c.h.b16 %v1085
    %v1291 = vunpack.c.l.b16 %v1086
    %v1292 = vunpack.c.h.b16 %v1086
    %v1293 = vunpack.c.l.b16 %v1087
    %v1294 = vunpack.c.h.b16 %v1087
    %v1295 = vunpack.c.l.b16 %v1088
    %v1296 = vunpack.c.l.b16 %v1089
    %v1297 = vunpack.c.h.b16 %v1089
    %v1298 = vunpack.c.l.b16 %v1090
    %v1299 = vunpack.c.h.b16 %v1090
    %v1300 = vunpack.c.l.b16 %v1091
    %v1301 = vunpack.c.h.b16 %v1091
    %v1302 = vunpack.c.l.b16 %v1092
    %v1303 = vunpack.c.l.b16 %v1093
    %v1304 = vunpack.c.h.b16 %v1093
    %v1305 = vunpack.c.l.b16 %v1094
    %v1306 = vunpack.c.h.b16 %v1094
    %v1307 = vunpack.c.l.b16 %v1095
    %v1308 = vunpack.c.h.b16 %v1095
    %v1309 = vunpack.c.l.b16 %v1096
    %v1310 = vpack.c.b16 %v1205, %v1198
    %v1311 = vpack.c.b16 %v1206, %v1199
    %v1312 = vpack.c.b16 %v1207, %v1200
    %v1313 = vpack.c.b16 %v1208, %v1201
    %v1314 = vpack.c.b16 %v1209, %v1202
    %v1315 = vpack.c.b16 %v1210, %v1203
    %v1316 = vpack.c.b16 %v1211, %v1204
    %v1317 = vpack.c.b16 %v1219, %v1212
    %v1318 = vpack.c.b16 %v1220, %v1213
    %v1319 = vpack.c.b16 %v1221, %v1214
    %v1320 = vpack.c.b16 %v1222, %v1215
    %v1321 = vpack.c.b16 %v1223, %v1216
    %v1322 = vpack.c.b16 %v1224, %v1217
    %v1323 = vpack.c.b16 %v1225, %v1218
    %v1324 = vpack.c.b16 %v1233, %v1226
    %v1325 = vpack.c.b16 %v1234, %v1227
    %v1326 = vpack.c.b16 %v1235, %v1228
    %v1327 = vpack.c.b16 %v1236, %v1229
    %v1328 = vpack.c.b16 %v1237, %v1230
    %v1329 = vpack.c.b16 %v1238, %v1231
    %v1330 = vpack.c.b16 %v1239, %v1232
    %v1331 = vpack.c.b16 %v1247, %v1240
    %v1332 = vpack.c.b16 %v1248, %v1241
    %v1333 = vpack.c.b16 %v1249, %v1242
    %v1334 = vpack.c.b16 %v1250, %v1243
    %v1335 = vpack.c.b16 %v1251, %v1244
    %v1336 = vpack.c.b16 %v1252, %v1245
    %v1337 = vpack.c.b16 %v1253, %v1246
    %v1338 = vpack.c.b16 %v1261, %v1254
    %v1339 = vpack.c.b16 %v1262, %v1255
    %v1340 = vpack.c.b16 %v1263, %v1256
    %v1341 = vpack.c.b16 %v1264, %v1257
    %v1342 = vpack.c.b16 %v1265, %v1258
    %v1343 = vpack.c.b16 %v1266, %v1259
    %v1344 = vpack.c.b16 %v1267, %v1260
    %v1345 = vpack.c.b16 %v1275, %v1268
    %v1346 = vpack.c.b16 %v1276, %v1269
    %v1347 = vpack.c.b16 %v1277, %v1270
    %v1348 = vpack.c.b16 %v1278, %v1271
    %v1349 = vpack.c.b16 %v1279, %v1272
    %v1350 = vpack.c.b16 %v1280, %v1273
    %v1351 = vpack.c.b16 %v1281, %v1274
    %v1352 = vpack.c.b16 %v1289, %v1282
    %v1353 = vpack.c.b16 %v1290, %v1283
    %v1354 = vpack.c.b16 %v1291, %v1284
    %v1355 = vpack.c.b16 %v1292, %v1285
    %v1356 = vpack.c.b16 %v1293, %v1286
    %v1357 = vpack.c.b16 %v1294, %v1287
    %v1358 = vpack.c.b16 %v1295, %v1288
    %v1359 = vpack.c.b16 %v1303, %v1296
    %v1360 = vpack.c.b16 %v1304, %v1297
    %v1361 = vpack.c.b16 %v1305, %v1298
    %v1362 = vpack.c.b16 %v1306, %v1299
    %v1363 = vpack.c.b16 %v1307, %v1300
    %v1364 = vpack.c.b16 %v1308, %v1301
    %v1365 = vpack.c.b16 %v1309, %v1302
    %1422 = vmatprep.subr.bf16.mxu0 %v1360
    %1423 = vmatpush1.bf16.msra.mxu0 %v1359
    %1424 = vmatprep.subr.bf16.mxu0 %v1353
    %1425 = vmatpush1.bf16.msra.mxu0 %v1352
    %1426 = vmatprep.subr.bf16.mxu0 %v1346
    %1427 = vmatpush1.bf16.msra.mxu0 %v1345
    %1428 = vmatprep.subr.bf16.mxu0 %v1339
    %1429 = vmatpush1.bf16.msra.mxu0 %v1338
    %1430 = vmatprep.subr.bf16.mxu0 %v1332
    %1431 = vmatpush1.bf16.msra.mxu0 %v1331
    %1432 = vmatprep.subr.bf16.mxu0 %v1325
    %1433 = vmatpush1.bf16.msra.mxu0 %v1324
    %1434 = vmatprep.subr.bf16.mxu0 %v1318
    %1435 = vmatpush1.bf16.msra.mxu0 %v1317
    %1436 = vmatprep.subr.bf16.mxu0 %v1311
    %1437 = vmatpush1.bf16.msra.mxu0 %v1310
    %1438 = vmatprep.subr.bf16.mxu0 0
    %1439 = vmatpush2.bf16.msra.mxu0 0
    %1440 = vmatprep.subr.bf16.mxu0 0
    %1441 = vmatpush2.bf16.msra.mxu0 0
    %1442 = vmatprep.subr.bf16.mxu0 0
    %1443 = vmatpush2.bf16.msra.mxu0 0
    %1444 = vmatprep.subr.bf16.mxu0 0
    %1445 = vmatpush2.bf16.msra.mxu0 0
    %1446 = vmatprep.subr.bf16.mxu0 0
    %1447 = vmatpush2.bf16.msra.mxu0 0
    %1448 = vmatprep.subr.bf16.mxu0 0
    %1449 = vmatpush2.bf16.msra.mxu0 0
    %1450 = vmatprep.subr.bf16.mxu0 0
    %1451 = vmatpush2.bf16.msra.mxu0 0
    %1452 = vmatprep.subr.bf16.mxu0 0
    %1453 = vmatpush2.bf16.msra.mxu0 0
    %1454 = vmatprep.mubr.bf16.mxu0 0
    %1455 = vmatmul.mubr.bf16.gmra.mxu0 %v1032
    %v1456 = vpop.f32.mrf.mxu0
    %v1457 = vadd.f32 %v1102, %v1456
    %v1458 = vpop.f32.mrf.mxu0
    %v1459 = vadd.f32 %v1106, %v1458
    %v1460 = vpop.f32.mrf.mxu0
    %v1461 = vpop.f32.mrf.mxu0
    %1462 = vdwg.mxu0
    %1463 = vmatprep.subr.bf16.mxu0 %v1362
    %1464 = vmatpush1.bf16.msra.mxu0 %v1361
    %1465 = vmatprep.subr.bf16.mxu0 %v1355
    %1466 = vmatpush1.bf16.msra.mxu0 %v1354
    %1467 = vmatprep.subr.bf16.mxu0 %v1348
    %1468 = vmatpush1.bf16.msra.mxu0 %v1347
    %1469 = vmatprep.subr.bf16.mxu0 %v1341
    %1470 = vmatpush1.bf16.msra.mxu0 %v1340
    %1471 = vmatprep.subr.bf16.mxu0 %v1334
    %1472 = vmatpush1.bf16.msra.mxu0 %v1333
    %1473 = vmatprep.subr.bf16.mxu0 %v1327
    %1474 = vmatpush1.bf16.msra.mxu0 %v1326
    %1475 = vmatprep.subr.bf16.mxu0 %v1320
    %1476 = vmatpush1.bf16.msra.mxu0 %v1319
    %1477 = vmatprep.subr.bf16.mxu0 %v1313
    %1478 = vmatpush1.bf16.msra.mxu0 %v1312
    %1479 = vmatprep.subr.bf16.mxu0 0
    %1480 = vmatpush2.bf16.msra.mxu0 0
    %1481 = vmatprep.subr.bf16.mxu0 0
    %1482 = vmatpush2.bf16.msra.mxu0 0
    %1483 = vmatprep.subr.bf16.mxu0 0
    %1484 = vmatpush2.bf16.msra.mxu0 0
    %1485 = vmatprep.subr.bf16.mxu0 0
    %1486 = vmatpush2.bf16.msra.mxu0 0
    %1487 = vmatprep.subr.bf16.mxu0 0
    %1488 = vmatpush2.bf16.msra.mxu0 0
    %1489 = vmatprep.subr.bf16.mxu0 0
    %1490 = vmatpush2.bf16.msra.mxu0 0
    %1491 = vmatprep.subr.bf16.mxu0 0
    %1492 = vmatpush2.bf16.msra.mxu0 0
    %1493 = vmatprep.subr.bf16.mxu0 0
    %1494 = vmatpush2.bf16.msra.mxu0 0
    %1495 = vmatprep.mubr.bf16.mxu0 0
    %1496 = vmatmul.mubr.bf16.gmra.mxu0 %v1032
    %v1497 = vpop.f32.mrf.mxu0
    %v1498 = vadd.f32 %v1110, %v1497
    %v1499 = vpop.f32.mrf.mxu0
    %v1500 = vadd.f32 %v1114, %v1499
    %v1501 = vpop.f32.mrf.mxu0
    %v1502 = vpop.f32.mrf.mxu0
    %1503 = vdwg.mxu0
    %1504 = vmatprep.subr.bf16.mxu0 %v1364
    %1505 = vmatpush1.bf16.msra.mxu0 %v1363
    %1506 = vmatprep.subr.bf16.mxu0 %v1357
    %1507 = vmatpush1.bf16.msra.mxu0 %v1356
    %1508 = vmatprep.subr.bf16.mxu0 %v1350
    %1509 = vmatpush1.bf16.msra.mxu0 %v1349
    %1510 = vmatprep.subr.bf16.mxu0 %v1343
    %1511 = vmatpush1.bf16.msra.mxu0 %v1342
    %1512 = vmatprep.subr.bf16.mxu0 %v1336
    %1513 = vmatpush1.bf16.msra.mxu0 %v1335
    %1514 = vmatprep.subr.bf16.mxu0 %v1329
    %1515 = vmatpush1.bf16.msra.mxu0 %v1328
    %1516 = vmatprep.subr.bf16.mxu0 %v1322
    %1517 = vmatpush1.bf16.msra.mxu0 %v1321
    %1518 = vmatprep.subr.bf16.mxu0 %v1315
    %1519 = vmatpush1.bf16.msra.mxu0 %v1314
    %1520 = vmatprep.subr.bf16.mxu0 0
    %1521 = vmatpush2.bf16.msra.mxu0 0
    %1522 = vmatprep.subr.bf16.mxu0 0
    %1523 = vmatpush2.bf16.msra.mxu0 0
    %1524 = vmatprep.subr.bf16.mxu0 0
    %1525 = vmatpush2.bf16.msra.mxu0 0
    %1526 = vmatprep.subr.bf16.mxu0 0
    %1527 = vmatpush2.bf16.msra.mxu0 0
    %1528 = vmatprep.subr.bf16.mxu0 0
    %1529 = vmatpush2.bf16.msra.mxu0 0
    %1530 = vmatprep.subr.bf16.mxu0 0
    %1531 = vmatpush2.bf16.msra.mxu0 0
    %1532 = vmatprep.subr.bf16.mxu0 0
    %1533 = vmatpush2.bf16.msra.mxu0 0
    %1534 = vmatprep.subr.bf16.mxu0 0
    %1535 = vmatpush2.bf16.msra.mxu0 0
    %1536 = vmatprep.mubr.bf16.mxu0 0
    %1537 = vmatmul.mubr.bf16.gmra.mxu0 %v1032
    %v1538 = vpop.f32.mrf.mxu0
    %v1539 = vadd.f32 %v1118, %v1538
    %v1540 = vpop.f32.mrf.mxu0
    %v1541 = vadd.f32 %v1122, %v1540
    %v1542 = vpop.f32.mrf.mxu0
    %v1543 = vpop.f32.mrf.mxu0
    %1544 = vdwg.mxu0
    %1545 = vmatprep.subr.bf16.mxu0 0
    %1546 = vmatpush1.bf16.msra.mxu0 %v1365
    %1547 = vmatprep.subr.bf16.mxu0 0
    %1548 = vmatpush1.bf16.msra.mxu0 %v1358
    %1549 = vmatprep.subr.bf16.mxu0 0
    %1550 = vmatpush1.bf16.msra.mxu0 %v1351
    %1551 = vmatprep.subr.bf16.mxu0 0
    %1552 = vmatpush1.bf16.msra.mxu0 %v1344
    %1553 = vmatprep.subr.bf16.mxu0 0
    %1554 = vmatpush1.bf16.msra.mxu0 %v1337
    %1555 = vmatprep.subr.bf16.mxu0 0
    %1556 = vmatpush1.bf16.msra.mxu0 %v1330
    %1557 = vmatprep.subr.bf16.mxu0 0
    %1558 = vmatpush1.bf16.msra.mxu0 %v1323
    %1559 = vmatprep.subr.bf16.mxu0 0
    %1560 = vmatpush1.bf16.msra.mxu0 %v1316
    %1561 = vmatprep.subr.bf16.mxu0 0
    %1562 = vmatpush2.bf16.msra.mxu0 0
    %1563 = vmatprep.subr.bf16.mxu0 0
    %1564 = vmatpush2.bf16.msra.mxu0 0
    %1565 = vmatprep.subr.bf16.mxu0 0
    %1566 = vmatpush2.bf16.msra.mxu0 0
    %1567 = vmatprep.subr.bf16.mxu0 0
    %1568 = vmatpush2.bf16.msra.mxu0 0
    %1569 = vmatprep.subr.bf16.mxu0 0
    %1570 = vmatpush2.bf16.msra.mxu0 0
    %1571 = vmatprep.subr.bf16.mxu0 0
    %1572 = vmatpush2.bf16.msra.mxu0 0
    %1573 = vmatprep.subr.bf16.mxu0 0
    %1574 = vmatpush2.bf16.msra.mxu0 0
    %1575 = vmatprep.subr.bf16.mxu0 0
    %1576 = vmatpush2.bf16.msra.mxu0 0
    %1577 = vmatprep.mubr.bf16.mxu0 0
    %1578 = vmatmul.mubr.bf16.gmra.mxu0 %v1032
    %v1579 = vpop.f32.mrf.mxu0
    %v1580 = vadd.f32 %v1126, %v1579
    %v1581 = vpop.f32.mrf.mxu0
    %v1582 = vpop.f32.mrf.mxu0
    %v1583 = vpop.f32.mrf.mxu0
    %1584 = vdwg.mxu0
    %v1585 = vxor.u32 %v1457, 2147483648
    %v1586 = vxor.u32 %v1459, 2147483648
    %v1587 = vxor.u32 %v1498, 2147483648
    %v1588 = vxor.u32 %v1500, 2147483648
    %v1589 = vxor.u32 %v1539, 2147483648
    %v1590 = vxor.u32 %v1541, 2147483648
    %v1591 = vxor.u32 %v1580, 2147483648
    %v1592 = vmul.f32 %v1585, 1.442695
    %v1593 = vpow.pop %v1592
    %v1594 = vmul.f32 %v1586, 1.442695
    %v1595 = vpow.pop %v1594
    %v1596 = vmul.f32 %v1587, 1.442695
    %v1597 = vpow.pop %v1596
    %v1598 = vmul.f32 %v1588, 1.442695
    %v1599 = vpow.pop %v1598
    %v1600 = vmul.f32 %v1589, 1.442695
    %v1601 = vpow.pop %v1600
    %v1602 = vmul.f32 %v1590, 1.442695
    %v1603 = vpow.pop %v1602
    %v1604 = vmul.f32 %v1591, 1.442695
    %v1605 = vpow.pop %v1604
    %v1606 = vadd.f32 %v1593, 1.0
    %v1607 = vadd.f32 %v1595, 1.0
    %v1608 = vadd.f32 %v1597, 1.0
    %v1609 = vadd.f32 %v1599, 1.0
    %v1610 = vadd.f32 %v1601, 1.0
    %v1611 = vadd.f32 %v1603, 1.0
    %v1612 = vadd.f32 %v1605, 1.0
    %v1613 = vrcp.pop %v1606
    %v1614 = vmul.f32 1.0, %v1613
    %v1615 = vrcp.pop %v1607
    %v1616 = vmul.f32 1.0, %v1615
    %v1617 = vrcp.pop %v1608
    %v1618 = vmul.f32 1.0, %v1617
    %v1619 = vrcp.pop %v1609
    %v1620 = vmul.f32 1.0, %v1619
    %v1621 = vrcp.pop %v1610
    %v1622 = vmul.f32 1.0, %v1621
    %v1623 = vrcp.pop %v1611
    %v1624 = vmul.f32 1.0, %v1623
    %v1625 = vrcp.pop %v1612
    %v1626 = vmul.f32 1.0, %v1625
    %1627 = vst [vmem:[%s12] sm:$0xff] %v1614
    %1628 = vst [vmem:[%s12 + $0x8] sm:$0xff] %v1616
    %1629 = vst [vmem:[%s12 + $0x10] sm:$0xff] %v1618
    %1630 = vst [vmem:[%s12 + $0x18] sm:$0xff] %v1620
    %1631 = vst [vmem:[%s12 + $0x20] sm:$0xff] %v1622
    %1632 = vst [vmem:[%s12 + $0x28] sm:$0xff] %v1624
    %1633 = vst [vmem:[%s12 + $0x30] sm:$0xff] %v1626
    // Predicated region
    $region46: #{autoencoder_forward.1} parent=1 // pred_check
      _
    $region47: #{autoencoder_forward.1} parent=1 // pred_check_branch
      %1635 = sbr.rel (0) target = $region49
    $region48: #{autoencoder_forward.1} parent=1 // pred_region
      %s1637 = ssub.s32 128, 128
      %1638 = vsyncadd [#allocation3], %s1637
      %s1640 = sshll.u32 [#allocation2], 4
      %s1641 = int_to_ptr.vmem [resolvable:$true] %s1640
      %1643 = dma.vmem_to_hbm [thread:$0]  %s1641, 128, %s11, [#allocation3]
    $region49: #{autoencoder_forward.1} parent=1 // pred_fallthru
      _
    // Predicated region
    $region50: #{autoencoder_forward.1} parent=1 // pred_check
      _
    $region51: #{autoencoder_forward.1} parent=1 // pred_check_branch
      %1645 = sbr.rel (0) target = $region53
    $region52: #{autoencoder_forward.1} parent=1 // pred_region
      _
    $region53: #{autoencoder_forward.1} parent=1 // pred_fallthru
      _
    // Predicated region
    $region54: #{autoencoder_forward.1} parent=1 // pred_check
      _
    $region55: #{autoencoder_forward.1} parent=1 // pred_check_branch
      %1647 = sbr.rel (0) target = $region57
    $region56: #{autoencoder_forward.1} parent=1 // pred_region
      %1648 = dma.done [#allocation3], 128
    $region57: #{autoencoder_forward.1} parent=1 // pred_fallthru
      _
    // Predicated region
    $region58: #{autoencoder_forward.1} parent=1 // pred_check
      _
    $region59: #{autoencoder_forward.1} parent=1 // pred_check_branch
      %1650 = sbr.rel (0) target = $region61
    $region60: #{autoencoder_forward.1} parent=1 // pred_region
      _
    $region61: #{autoencoder_forward.1} parent=1 // pred_fallthru
      _
    %1651 = vsyncpa [#allocation3], 1

</llo_original>
